<compile_context>
chip_gen: v7x
topology: tpu7x:2x2x1
jax: 0.10.0
libtpu: 0.0.40
codegen_flags: <defaults>
</compile_context>

<pallas_src>
import jax
import jax.numpy as jnp
from jax.experimental import pallas as pl
from jax.experimental.pallas import tpu as pltpu


def _make_qcnn_kernel(p_valid: int):
    """Builds the kernel; `p_valid` = true (unpadded) spatial size (H/2)*(W/2)."""

    def kernel(patches_ref, wlane_ref, gamma_ref, beta_ref,
               whead_ref, bhead_ref, out_ref):
        eps = 1e-5
        K, N, Pp = patches_ref.shape          # (4, N, Ppad)
        A, CPp = whead_ref.shape              # (A, C*Ppad)
        C = CPp // Pp
        inv_count = 1.0 / float(N * p_valid)  # biased batch stats over (N, H/2, W/2)
        pad_ratio = float(Pp - p_valid) / float(p_valid)

        # --- Patch planes and their batch means (channel-independent) --------
        planes = [patches_ref[k] for k in range(K)]              # each (N, Ppad)
        mus = []
        for k in range(K):
            s = jnp.sum(planes[k], axis=1, keepdims=True)        # (N, 1) lane reduce
            s = jnp.sum(s, axis=0, keepdims=True)                # (1, 1) sublane reduce
            mus.append(s * inv_count)                            # zero padding adds 0

        # Centered planes: h_c - mean_c == sum_k wconv[c,k] * q_k exactly, so
        # neither the per-channel batch mean nor the conv bias is ever needed.
        qs = [planes[k] - mus[k] for k in range(K)]

        # --- 4x4 covariance of the patch planes (10 unique entries) ----------
        cov = {}
        for k in range(K):
            for l in range(k, K):
                s = jnp.sum(qs[k] * qs[l], axis=1, keepdims=True)
                s = jnp.sum(s, axis=0, keepdims=True) * inv_count       # (1, 1)
                if pad_ratio > 0.0:
                    # padded lanes of q hold (0 - mu); remove their exact term
                    s = s - pad_ratio * (mus[k] * mus[l])
                cov[(k, l)] = s

        # --- Per-channel BN scale, in lane-replicated (1, C*Ppad) form -------
        # var_c = w_c^T Cov w_c ; scale_c = gamma_c * rsqrt(var_c + eps)
        wl = [wlane_ref[k:k + 1, :] for k in range(K)]           # each (1, C*Ppad)
        var = None
        for k in range(K):
            for l in range(k, K):
                fac = 1.0 if k == l else 2.0
                term = (wl[k] * wl[l]) * (fac * cov[(k, l)])
                var = term if var is None else var + term
        scale = gamma_ref[...] * jax.lax.rsqrt(var + eps)        # (1, C*Ppad)

        # --- Conv2d(1,16,k=2,s=2) + BN + ReLU, all channels at once ----------
        # hidden[n, c*Ppad+p] = relu(sum_k q_k[n,p] * (wconv[c,k]*scale_c) + beta_c)
        acc = None
        for k in range(K):                                       # K = 4, static
            q_wide = jnp.concatenate([qs[k]] * C, axis=1)        # (N, C*Ppad), aligned blocks
            term = q_wide * (wl[k] * scale)                      # BN folded into conv weight
            acc = term if acc is None else acc + term
        hidden = jnp.maximum(acc + beta_ref[...], 0.0)           # (N, C*Ppad)

        # --- Linear head: one (N, C*Ppad) x (C*Ppad, A) MXU contraction ------
        out = jax.lax.dot_general(
            hidden, whead_ref[...],
            dimension_numbers=(((1,), (1,)), ((), ())),
            preferred_element_type=jnp.float32)
        out_ref[...] = out + bhead_ref[...]

    return kernel


def cnn_model_forward(x, params):
    """x: (N, 1, H, W) float32 NCHW (PyTorch layout). Returns (N, A) Q-values.

    Matches CNNModel.forward with BatchNorm2d in training mode (batch stats).
    """
    N, Cin, H, W = x.shape
    assert Cin == 1 and H % 2 == 0 and W % 2 == 0
    Hc, Wc = H // 2, W // 2
    P = Hc * Wc
    Ppad = ((P + 127) // 128) * 128          # lane-dense, 128-aligned spatial axis

    wconv = params["wconv"]    # (16, 1, 2, 2)
    gamma = params["gamma"]    # (16,)
    beta = params["beta"]      # (16,)
    whead = params["whead"]    # (A, 16*P)
    bhead = params["bhead"]    # (A,)
    C = wconv.shape[0]
    A = whead.shape[0]
    # NOTE: params["bconv"] is intentionally not consumed by the kernel:
    # training-mode BatchNorm subtracts the per-channel batch mean, which
    # absorbs the conv bias exactly (the reference check below includes bconv
    # and still matches).

    # space-to-depth: (N,1,H,W) -> (4, N, Ppad); plane k = kh*2 + kw matches the
    # flattened conv kernel; the spatial axis stays on lanes, zero-padded.
    # TODO(synk): fold this one transpose into the kernel with strided loads to
    # drop the extra XLA dispatch + HBM pass over x.
    pat = (x.reshape(N, Hc, 2, Wc, 2)
            .transpose(2, 4, 0, 1, 3)
            .reshape(4, N, P)).astype(jnp.float32)
    if Ppad != P:
        pat = jnp.pad(pat, ((0, 0), (0, 0), (0, Ppad - P)))

    # Per-channel parameters replicated across each channel's lane block so the
    # kernel applies them with plain row broadcasts (no SMEM scalar splats).
    wconv_k = wconv.reshape(C, 4).astype(jnp.float32)                    # (C, 4)
    w_lane = jnp.repeat(wconv_k.T, Ppad, axis=1)                         # (4, C*Ppad)
    gamma_lane = jnp.repeat(gamma.astype(jnp.float32), Ppad).reshape(1, C * Ppad)
    beta_lane = jnp.repeat(beta.astype(jnp.float32), Ppad).reshape(1, C * Ppad)
    whead_lane = whead.reshape(A, C, P).astype(jnp.float32)              # PyTorch (c,h,w) order
    if Ppad != P:
        whead_lane = jnp.pad(whead_lane, ((0, 0), (0, 0), (0, Ppad - P)))
    whead_lane = whead_lane.reshape(A, C * Ppad)                         # (A, C*Ppad)
    bhead_k = bhead.reshape(1, A).astype(jnp.float32)

    # Resident working set + (q_wide / hidden) temporaries, with headroom.
    in_bytes = 4 * (pat.size + w_lane.size + gamma_lane.size + beta_lane.size
                    + whead_lane.size + bhead_k.size)
    tmp_bytes = 4 * N * C * Ppad * 4
    vmem_limit = int(min(96 * 1024 * 1024,
                         max(32 * 1024 * 1024, 2 * in_bytes + tmp_bytes)))

    # TODO(synk): for replay-batch sizes where N*C*Ppad*4B approaches VMEM
    # (notably v7x's 64 MiB), add a grid over N with
    # dimension_semantics=("parallel",) and keep the analytic stats (or a
    # separate stats pass) so N-tiles stay independent; this gridless
    # single-shot is sized for small demo batches.
    vmem = pltpu.MemorySpace.VMEM
    out = pl.pallas_call(
        _make_qcnn_kernel(P),
        out_shape=jax.ShapeDtypeStruct((N, A), jnp.float32),
        in_specs=[pl.BlockSpec(memory_space=vmem) for _ in range(6)],
        out_specs=pl.BlockSpec(memory_space=vmem),
        compiler_params=pltpu.CompilerParams(vmem_limit_bytes=vmem_limit),
    )(pat, w_lane, gamma_lane, beta_lane, whead_lane, bhead_k)
    return out


def init_params(key, action_space_size, img_width, img_height):
    Hc, Wc = img_height // 2, img_width // 2
    lin_in = Hc * Wc * 16
    ks = jax.random.split(key, 6)
    return {
        "wconv": 0.1 * jax.random.normal(ks[0], (16, 1, 2, 2), jnp.float32),
        "bconv": 0.1 * jax.random.normal(ks[1], (16,), jnp.float32),
        "gamma": 1.0 + 0.05 * jax.random.normal(ks[2], (16,), jnp.float32),
        "beta": 0.05 * jax.random.normal(ks[3], (16,), jnp.float32),
        "whead": 0.05 * jax.random.normal(ks[4], (action_space_size, lin_in),
                                          jnp.float32),
        "bhead": 0.05 * jax.random.normal(ks[5], (action_space_size,),
                                          jnp.float32),
    }


if __name__ == "__main__":
    key = jax.random.PRNGKey(0)
    N, H, W, A = 2, 16, 16, 4
    pkey, xkey = jax.random.split(key)
    params = init_params(pkey, action_space_size=A, img_width=W, img_height=H)
    x = jax.random.normal(xkey, (N, 1, H, W), jnp.float32)

    q_values = cnn_model_forward(x, params)
    jax.block_until_ready(q_values)
    assert q_values.shape == (N, A) and q_values.dtype == jnp.float32

    # Pure-JAX reference of the same forward pass (training-mode BN, includes
    # the conv bias, which must cancel exactly).
    Hc, Wc = H // 2, W // 2
    pat_ref = (x.reshape(N, Hc, 2, Wc, 2).transpose(0, 1, 3, 2, 4)
                .reshape(N, Hc, Wc, 4))
    h = jnp.einsum("nhwk,ck->nchw", pat_ref, params["wconv"].reshape(16, 4),
                   precision=jax.lax.Precision.HIGHEST)
    h = h + params["bconv"][None, :, None, None]
    mean = h.mean(axis=(0, 2, 3), keepdims=True)
    var = ((h - mean) ** 2).mean(axis=(0, 2, 3), keepdims=True)
    h = (h - mean) * jax.lax.rsqrt(var + 1e-5)
    h = h * params["gamma"][None, :, None, None] + params["beta"][None, :, None, None]
    h = jnp.maximum(h, 0.0).reshape(N, -1)
    ref = jnp.dot(h, params["whead"].T,
                  precision=jax.lax.Precision.HIGHEST) + params["bhead"]
    assert jnp.allclose(q_values, ref, rtol=1e-3, atol=1e-3), (
        float(jnp.max(jnp.abs(q_values - ref))))

    print("KERNEL_OK")
</pallas_src>

<mosaic_0001>
module attributes {stable_mosaic.version = 11 : i64} {
  func.func @kernel(%arg0: memref<4x2x128xf32, #tpu.memory_space<vmem>>, %arg1: memref<4x2048xf32, #tpu.memory_space<vmem>>, %arg2: memref<1x2048xf32, #tpu.memory_space<vmem>>, %arg3: memref<1x2048xf32, #tpu.memory_space<vmem>>, %arg4: memref<4x2048xf32, #tpu.memory_space<vmem>>, %arg5: memref<1x4xf32, #tpu.memory_space<vmem>>, %arg6: memref<2x4xf32, #tpu.memory_space<vmem>>) attributes {dimension_semantics = [], scalar_prefetch = 0 : i64, scratch_operands = 0 : i64, tpu.core_type = #tpu.core_type<tc>} {
    %c0 = arith.constant 0 : index
    %c0_0 = arith.constant 0 : index
    %c0_1 = arith.constant 0 : index
    %0 = vector.load %arg0[%c0, %c0_0, %c0_1] : memref<4x2x128xf32, #tpu.memory_space<vmem>>, vector<1x2x128xf32>
    %1 = vector.shape_cast %0 : vector<1x2x128xf32> to vector<2x128xf32>
    %c1 = arith.constant 1 : index
    %c0_2 = arith.constant 0 : index
    %c0_3 = arith.constant 0 : index
    %2 = vector.load %arg0[%c1, %c0_2, %c0_3] : memref<4x2x128xf32, #tpu.memory_space<vmem>>, vector<1x2x128xf32>
    %3 = vector.shape_cast %2 : vector<1x2x128xf32> to vector<2x128xf32>
    %c2 = arith.constant 2 : index
    %c0_4 = arith.constant 0 : index
    %c0_5 = arith.constant 0 : index
    %4 = vector.load %arg0[%c2, %c0_4, %c0_5] : memref<4x2x128xf32, #tpu.memory_space<vmem>>, vector<1x2x128xf32>
    %5 = vector.shape_cast %4 : vector<1x2x128xf32> to vector<2x128xf32>
    %c3 = arith.constant 3 : index
    %c0_6 = arith.constant 0 : index
    %c0_7 = arith.constant 0 : index
    %6 = vector.load %arg0[%c3, %c0_6, %c0_7] : memref<4x2x128xf32, #tpu.memory_space<vmem>>, vector<1x2x128xf32>
    %7 = vector.shape_cast %6 : vector<1x2x128xf32> to vector<2x128xf32>
    %cst = arith.constant dense<0.000000e+00> : vector<2xf32>
    %8 = vector.multi_reduction <add>, %1, %cst [1] : vector<2x128xf32> to vector<2xf32>
    %9 = vector.shape_cast %8 : vector<2xf32> to vector<2x1xf32>
    %cst_8 = arith.constant dense<0.000000e+00> : vector<1xf32>
    %10 = vector.multi_reduction <add>, %9, %cst_8 [0] : vector<2x1xf32> to vector<1xf32>
    %11 = vector.shape_cast %10 : vector<1xf32> to vector<1x1xf32>
    %cst_9 = arith.constant 7.812500e-03 : f32
    %12 = vector.broadcast %cst_9 : f32 to vector<1x1xf32>
    %13 = arith.mulf %11, %12 : vector<1x1xf32>
    %cst_10 = arith.constant dense<0.000000e+00> : vector<2xf32>
    %14 = vector.multi_reduction <add>, %3, %cst_10 [1] : vector<2x128xf32> to vector<2xf32>
    %15 = vector.shape_cast %14 : vector<2xf32> to vector<2x1xf32>
    %cst_11 = arith.constant dense<0.000000e+00> : vector<1xf32>
    %16 = vector.multi_reduction <add>, %15, %cst_11 [0] : vector<2x1xf32> to vector<1xf32>
    %17 = vector.shape_cast %16 : vector<1xf32> to vector<1x1xf32>
    %cst_12 = arith.constant 7.812500e-03 : f32
    %18 = vector.broadcast %cst_12 : f32 to vector<1x1xf32>
    %19 = arith.mulf %17, %18 : vector<1x1xf32>
    %cst_13 = arith.constant dense<0.000000e+00> : vector<2xf32>
    %20 = vector.multi_reduction <add>, %5, %cst_13 [1] : vector<2x128xf32> to vector<2xf32>
    %21 = vector.shape_cast %20 : vector<2xf32> to vector<2x1xf32>
    %cst_14 = arith.constant dense<0.000000e+00> : vector<1xf32>
    %22 = vector.multi_reduction <add>, %21, %cst_14 [0] : vector<2x1xf32> to vector<1xf32>
    %23 = vector.shape_cast %22 : vector<1xf32> to vector<1x1xf32>
    %cst_15 = arith.constant 7.812500e-03 : f32
    %24 = vector.broadcast %cst_15 : f32 to vector<1x1xf32>
    %25 = arith.mulf %23, %24 : vector<1x1xf32>
    %cst_16 = arith.constant dense<0.000000e+00> : vector<2xf32>
    %26 = vector.multi_reduction <add>, %7, %cst_16 [1] : vector<2x128xf32> to vector<2xf32>
    %27 = vector.shape_cast %26 : vector<2xf32> to vector<2x1xf32>
    %cst_17 = arith.constant dense<0.000000e+00> : vector<1xf32>
    %28 = vector.multi_reduction <add>, %27, %cst_17 [0] : vector<2x1xf32> to vector<1xf32>
    %29 = vector.shape_cast %28 : vector<1xf32> to vector<1x1xf32>
    %cst_18 = arith.constant 7.812500e-03 : f32
    %30 = vector.broadcast %cst_18 : f32 to vector<1x1xf32>
    %31 = arith.mulf %29, %30 : vector<1x1xf32>
    %32 = vector.broadcast %13 : vector<1x1xf32> to vector<2x128xf32>
    %33 = arith.subf %1, %32 : vector<2x128xf32>
    %34 = vector.broadcast %19 : vector<1x1xf32> to vector<2x128xf32>
    %35 = arith.subf %3, %34 : vector<2x128xf32>
    %36 = vector.broadcast %25 : vector<1x1xf32> to vector<2x128xf32>
    %37 = arith.subf %5, %36 : vector<2x128xf32>
    %38 = vector.broadcast %31 : vector<1x1xf32> to vector<2x128xf32>
    %39 = arith.subf %7, %38 : vector<2x128xf32>
    %40 = arith.mulf %33, %33 : vector<2x128xf32>
    %cst_19 = arith.constant dense<0.000000e+00> : vector<2xf32>
    %41 = vector.multi_reduction <add>, %40, %cst_19 [1] : vector<2x128xf32> to vector<2xf32>
    %42 = vector.shape_cast %41 : vector<2xf32> to vector<2x1xf32>
    %cst_20 = arith.constant dense<0.000000e+00> : vector<1xf32>
    %43 = vector.multi_reduction <add>, %42, %cst_20 [0] : vector<2x1xf32> to vector<1xf32>
    %44 = vector.shape_cast %43 : vector<1xf32> to vector<1x1xf32>
    %cst_21 = arith.constant 7.812500e-03 : f32
    %45 = vector.broadcast %cst_21 : f32 to vector<1x1xf32>
    %46 = arith.mulf %44, %45 : vector<1x1xf32>
    %47 = arith.mulf %13, %13 : vector<1x1xf32>
    %cst_22 = arith.constant 1.000000e+00 : f32
    %48 = vector.broadcast %cst_22 : f32 to vector<1x1xf32>
    %49 = arith.mulf %48, %47 : vector<1x1xf32>
    %50 = arith.subf %46, %49 : vector<1x1xf32>
    %51 = arith.mulf %33, %35 : vector<2x128xf32>
    %cst_23 = arith.constant dense<0.000000e+00> : vector<2xf32>
    %52 = vector.multi_reduction <add>, %51, %cst_23 [1] : vector<2x128xf32> to vector<2xf32>
    %53 = vector.shape_cast %52 : vector<2xf32> to vector<2x1xf32>
    %cst_24 = arith.constant dense<0.000000e+00> : vector<1xf32>
    %54 = vector.multi_reduction <add>, %53, %cst_24 [0] : vector<2x1xf32> to vector<1xf32>
    %55 = vector.shape_cast %54 : vector<1xf32> to vector<1x1xf32>
    %cst_25 = arith.constant 7.812500e-03 : f32
    %56 = vector.broadcast %cst_25 : f32 to vector<1x1xf32>
    %57 = arith.mulf %55, %56 : vector<1x1xf32>
    %58 = arith.mulf %13, %19 : vector<1x1xf32>
    %cst_26 = arith.constant 1.000000e+00 : f32
    %59 = vector.broadcast %cst_26 : f32 to vector<1x1xf32>
    %60 = arith.mulf %59, %58 : vector<1x1xf32>
    %61 = arith.subf %57, %60 : vector<1x1xf32>
    %62 = arith.mulf %33, %37 : vector<2x128xf32>
    %cst_27 = arith.constant dense<0.000000e+00> : vector<2xf32>
    %63 = vector.multi_reduction <add>, %62, %cst_27 [1] : vector<2x128xf32> to vector<2xf32>
    %64 = vector.shape_cast %63 : vector<2xf32> to vector<2x1xf32>
    %cst_28 = arith.constant dense<0.000000e+00> : vector<1xf32>
    %65 = vector.multi_reduction <add>, %64, %cst_28 [0] : vector<2x1xf32> to vector<1xf32>
    %66 = vector.shape_cast %65 : vector<1xf32> to vector<1x1xf32>
    %cst_29 = arith.constant 7.812500e-03 : f32
    %67 = vector.broadcast %cst_29 : f32 to vector<1x1xf32>
    %68 = arith.mulf %66, %67 : vector<1x1xf32>
    %69 = arith.mulf %13, %25 : vector<1x1xf32>
    %cst_30 = arith.constant 1.000000e+00 : f32
    %70 = vector.broadcast %cst_30 : f32 to vector<1x1xf32>
    %71 = arith.mulf %70, %69 : vector<1x1xf32>
    %72 = arith.subf %68, %71 : vector<1x1xf32>
    %73 = arith.mulf %33, %39 : vector<2x128xf32>
    %cst_31 = arith.constant dense<0.000000e+00> : vector<2xf32>
    %74 = vector.multi_reduction <add>, %73, %cst_31 [1] : vector<2x128xf32> to vector<2xf32>
    %75 = vector.shape_cast %74 : vector<2xf32> to vector<2x1xf32>
    %cst_32 = arith.constant dense<0.000000e+00> : vector<1xf32>
    %76 = vector.multi_reduction <add>, %75, %cst_32 [0] : vector<2x1xf32> to vector<1xf32>
    %77 = vector.shape_cast %76 : vector<1xf32> to vector<1x1xf32>
    %cst_33 = arith.constant 7.812500e-03 : f32
    %78 = vector.broadcast %cst_33 : f32 to vector<1x1xf32>
    %79 = arith.mulf %77, %78 : vector<1x1xf32>
    %80 = arith.mulf %13, %31 : vector<1x1xf32>
    %cst_34 = arith.constant 1.000000e+00 : f32
    %81 = vector.broadcast %cst_34 : f32 to vector<1x1xf32>
    %82 = arith.mulf %81, %80 : vector<1x1xf32>
    %83 = arith.subf %79, %82 : vector<1x1xf32>
    %84 = arith.mulf %35, %35 : vector<2x128xf32>
    %cst_35 = arith.constant dense<0.000000e+00> : vector<2xf32>
    %85 = vector.multi_reduction <add>, %84, %cst_35 [1] : vector<2x128xf32> to vector<2xf32>
    %86 = vector.shape_cast %85 : vector<2xf32> to vector<2x1xf32>
    %cst_36 = arith.constant dense<0.000000e+00> : vector<1xf32>
    %87 = vector.multi_reduction <add>, %86, %cst_36 [0] : vector<2x1xf32> to vector<1xf32>
    %88 = vector.shape_cast %87 : vector<1xf32> to vector<1x1xf32>
    %cst_37 = arith.constant 7.812500e-03 : f32
    %89 = vector.broadcast %cst_37 : f32 to vector<1x1xf32>
    %90 = arith.mulf %88, %89 : vector<1x1xf32>
    %91 = arith.mulf %19, %19 : vector<1x1xf32>
    %cst_38 = arith.constant 1.000000e+00 : f32
    %92 = vector.broadcast %cst_38 : f32 to vector<1x1xf32>
    %93 = arith.mulf %92, %91 : vector<1x1xf32>
    %94 = arith.subf %90, %93 : vector<1x1xf32>
    %95 = arith.mulf %35, %37 : vector<2x128xf32>
    %cst_39 = arith.constant dense<0.000000e+00> : vector<2xf32>
    %96 = vector.multi_reduction <add>, %95, %cst_39 [1] : vector<2x128xf32> to vector<2xf32>
    %97 = vector.shape_cast %96 : vector<2xf32> to vector<2x1xf32>
    %cst_40 = arith.constant dense<0.000000e+00> : vector<1xf32>
    %98 = vector.multi_reduction <add>, %97, %cst_40 [0] : vector<2x1xf32> to vector<1xf32>
    %99 = vector.shape_cast %98 : vector<1xf32> to vector<1x1xf32>
    %cst_41 = arith.constant 7.812500e-03 : f32
    %100 = vector.broadcast %cst_41 : f32 to vector<1x1xf32>
    %101 = arith.mulf %99, %100 : vector<1x1xf32>
    %102 = arith.mulf %19, %25 : vector<1x1xf32>
    %cst_42 = arith.constant 1.000000e+00 : f32
    %103 = vector.broadcast %cst_42 : f32 to vector<1x1xf32>
    %104 = arith.mulf %103, %102 : vector<1x1xf32>
    %105 = arith.subf %101, %104 : vector<1x1xf32>
    %106 = arith.mulf %35, %39 : vector<2x128xf32>
    %cst_43 = arith.constant dense<0.000000e+00> : vector<2xf32>
    %107 = vector.multi_reduction <add>, %106, %cst_43 [1] : vector<2x128xf32> to vector<2xf32>
    %108 = vector.shape_cast %107 : vector<2xf32> to vector<2x1xf32>
    %cst_44 = arith.constant dense<0.000000e+00> : vector<1xf32>
    %109 = vector.multi_reduction <add>, %108, %cst_44 [0] : vector<2x1xf32> to vector<1xf32>
    %110 = vector.shape_cast %109 : vector<1xf32> to vector<1x1xf32>
    %cst_45 = arith.constant 7.812500e-03 : f32
    %111 = vector.broadcast %cst_45 : f32 to vector<1x1xf32>
    %112 = arith.mulf %110, %111 : vector<1x1xf32>
    %113 = arith.mulf %19, %31 : vector<1x1xf32>
    %cst_46 = arith.constant 1.000000e+00 : f32
    %114 = vector.broadcast %cst_46 : f32 to vector<1x1xf32>
    %115 = arith.mulf %114, %113 : vector<1x1xf32>
    %116 = arith.subf %112, %115 : vector<1x1xf32>
    %117 = arith.mulf %37, %37 : vector<2x128xf32>
    %cst_47 = arith.constant dense<0.000000e+00> : vector<2xf32>
    %118 = vector.multi_reduction <add>, %117, %cst_47 [1] : vector<2x128xf32> to vector<2xf32>
    %119 = vector.shape_cast %118 : vector<2xf32> to vector<2x1xf32>
    %cst_48 = arith.constant dense<0.000000e+00> : vector<1xf32>
    %120 = vector.multi_reduction <add>, %119, %cst_48 [0] : vector<2x1xf32> to vector<1xf32>
    %121 = vector.shape_cast %120 : vector<1xf32> to vector<1x1xf32>
    %cst_49 = arith.constant 7.812500e-03 : f32
    %122 = vector.broadcast %cst_49 : f32 to vector<1x1xf32>
    %123 = arith.mulf %121, %122 : vector<1x1xf32>
    %124 = arith.mulf %25, %25 : vector<1x1xf32>
    %cst_50 = arith.constant 1.000000e+00 : f32
    %125 = vector.broadcast %cst_50 : f32 to vector<1x1xf32>
    %126 = arith.mulf %125, %124 : vector<1x1xf32>
    %127 = arith.subf %123, %126 : vector<1x1xf32>
    %128 = arith.mulf %37, %39 : vector<2x128xf32>
    %cst_51 = arith.constant dense<0.000000e+00> : vector<2xf32>
    %129 = vector.multi_reduction <add>, %128, %cst_51 [1] : vector<2x128xf32> to vector<2xf32>
    %130 = vector.shape_cast %129 : vector<2xf32> to vector<2x1xf32>
    %cst_52 = arith.constant dense<0.000000e+00> : vector<1xf32>
    %131 = vector.multi_reduction <add>, %130, %cst_52 [0] : vector<2x1xf32> to vector<1xf32>
    %132 = vector.shape_cast %131 : vector<1xf32> to vector<1x1xf32>
    %cst_53 = arith.constant 7.812500e-03 : f32
    %133 = vector.broadcast %cst_53 : f32 to vector<1x1xf32>
    %134 = arith.mulf %132, %133 : vector<1x1xf32>
    %135 = arith.mulf %25, %31 : vector<1x1xf32>
    %cst_54 = arith.constant 1.000000e+00 : f32
    %136 = vector.broadcast %cst_54 : f32 to vector<1x1xf32>
    %137 = arith.mulf %136, %135 : vector<1x1xf32>
    %138 = arith.subf %134, %137 : vector<1x1xf32>
    %139 = arith.mulf %39, %39 : vector<2x128xf32>
    %cst_55 = arith.constant dense<0.000000e+00> : vector<2xf32>
    %140 = vector.multi_reduction <add>, %139, %cst_55 [1] : vector<2x128xf32> to vector<2xf32>
    %141 = vector.shape_cast %140 : vector<2xf32> to vector<2x1xf32>
    %cst_56 = arith.constant dense<0.000000e+00> : vector<1xf32>
    %142 = vector.multi_reduction <add>, %141, %cst_56 [0] : vector<2x1xf32> to vector<1xf32>
    %143 = vector.shape_cast %142 : vector<1xf32> to vector<1x1xf32>
    %cst_57 = arith.constant 7.812500e-03 : f32
    %144 = vector.broadcast %cst_57 : f32 to vector<1x1xf32>
    %145 = arith.mulf %143, %144 : vector<1x1xf32>
    %146 = arith.mulf %31, %31 : vector<1x1xf32>
    %cst_58 = arith.constant 1.000000e+00 : f32
    %147 = vector.broadcast %cst_58 : f32 to vector<1x1xf32>
    %148 = arith.mulf %147, %146 : vector<1x1xf32>
    %149 = arith.subf %145, %148 : vector<1x1xf32>
    %c0_59 = arith.constant 0 : index
    %c0_60 = arith.constant 0 : index
    %150 = vector.load %arg1[%c0_59, %c0_60] : memref<4x2048xf32, #tpu.memory_space<vmem>>, vector<1x2048xf32>
    %c1_61 = arith.constant 1 : index
    %c0_62 = arith.constant 0 : index
    %151 = vector.load %arg1[%c1_61, %c0_62] : memref<4x2048xf32, #tpu.memory_space<vmem>>, vector<1x2048xf32>
    %c2_63 = arith.constant 2 : index
    %c0_64 = arith.constant 0 : index
    %152 = vector.load %arg1[%c2_63, %c0_64] : memref<4x2048xf32, #tpu.memory_space<vmem>>, vector<1x2048xf32>
    %c3_65 = arith.constant 3 : index
    %c0_66 = arith.constant 0 : index
    %153 = vector.load %arg1[%c3_65, %c0_66] : memref<4x2048xf32, #tpu.memory_space<vmem>>, vector<1x2048xf32>
    %154 = arith.mulf %150, %150 : vector<1x2048xf32>
    %cst_67 = arith.constant 1.000000e+00 : f32
    %155 = vector.broadcast %cst_67 : f32 to vector<1x1xf32>
    %156 = arith.mulf %155, %50 : vector<1x1xf32>
    %157 = vector.broadcast %156 : vector<1x1xf32> to vector<1x2048xf32>
    %158 = arith.mulf %154, %157 : vector<1x2048xf32>
    %159 = arith.mulf %150, %151 : vector<1x2048xf32>
    %cst_68 = arith.constant 2.000000e+00 : f32
    %160 = vector.broadcast %cst_68 : f32 to vector<1x1xf32>
    %161 = arith.mulf %160, %61 : vector<1x1xf32>
    %162 = vector.broadcast %161 : vector<1x1xf32> to vector<1x2048xf32>
    %163 = arith.mulf %159, %162 : vector<1x2048xf32>
    %164 = arith.addf %158, %163 : vector<1x2048xf32>
    %165 = arith.mulf %150, %152 : vector<1x2048xf32>
    %cst_69 = arith.constant 2.000000e+00 : f32
    %166 = vector.broadcast %cst_69 : f32 to vector<1x1xf32>
    %167 = arith.mulf %166, %72 : vector<1x1xf32>
    %168 = vector.broadcast %167 : vector<1x1xf32> to vector<1x2048xf32>
    %169 = arith.mulf %165, %168 : vector<1x2048xf32>
    %170 = arith.addf %164, %169 : vector<1x2048xf32>
    %171 = arith.mulf %150, %153 : vector<1x2048xf32>
    %cst_70 = arith.constant 2.000000e+00 : f32
    %172 = vector.broadcast %cst_70 : f32 to vector<1x1xf32>
    %173 = arith.mulf %172, %83 : vector<1x1xf32>
    %174 = vector.broadcast %173 : vector<1x1xf32> to vector<1x2048xf32>
    %175 = arith.mulf %171, %174 : vector<1x2048xf32>
    %176 = arith.addf %170, %175 : vector<1x2048xf32>
    %177 = arith.mulf %151, %151 : vector<1x2048xf32>
    %cst_71 = arith.constant 1.000000e+00 : f32
    %178 = vector.broadcast %cst_71 : f32 to vector<1x1xf32>
    %179 = arith.mulf %178, %94 : vector<1x1xf32>
    %180 = vector.broadcast %179 : vector<1x1xf32> to vector<1x2048xf32>
    %181 = arith.mulf %177, %180 : vector<1x2048xf32>
    %182 = arith.addf %176, %181 : vector<1x2048xf32>
    %183 = arith.mulf %151, %152 : vector<1x2048xf32>
    %cst_72 = arith.constant 2.000000e+00 : f32
    %184 = vector.broadcast %cst_72 : f32 to vector<1x1xf32>
    %185 = arith.mulf %184, %105 : vector<1x1xf32>
    %186 = vector.broadcast %185 : vector<1x1xf32> to vector<1x2048xf32>
    %187 = arith.mulf %183, %186 : vector<1x2048xf32>
    %188 = arith.addf %182, %187 : vector<1x2048xf32>
    %189 = arith.mulf %151, %153 : vector<1x2048xf32>
    %cst_73 = arith.constant 2.000000e+00 : f32
    %190 = vector.broadcast %cst_73 : f32 to vector<1x1xf32>
    %191 = arith.mulf %190, %116 : vector<1x1xf32>
    %192 = vector.broadcast %191 : vector<1x1xf32> to vector<1x2048xf32>
    %193 = arith.mulf %189, %192 : vector<1x2048xf32>
    %194 = arith.addf %188, %193 : vector<1x2048xf32>
    %195 = arith.mulf %152, %152 : vector<1x2048xf32>
    %cst_74 = arith.constant 1.000000e+00 : f32
    %196 = vector.broadcast %cst_74 : f32 to vector<1x1xf32>
    %197 = arith.mulf %196, %127 : vector<1x1xf32>
    %198 = vector.broadcast %197 : vector<1x1xf32> to vector<1x2048xf32>
    %199 = arith.mulf %195, %198 : vector<1x2048xf32>
    %200 = arith.addf %194, %199 : vector<1x2048xf32>
    %201 = arith.mulf %152, %153 : vector<1x2048xf32>
    %cst_75 = arith.constant 2.000000e+00 : f32
    %202 = vector.broadcast %cst_75 : f32 to vector<1x1xf32>
    %203 = arith.mulf %202, %138 : vector<1x1xf32>
    %204 = vector.broadcast %203 : vector<1x1xf32> to vector<1x2048xf32>
    %205 = arith.mulf %201, %204 : vector<1x2048xf32>
    %206 = arith.addf %200, %205 : vector<1x2048xf32>
    %207 = arith.mulf %153, %153 : vector<1x2048xf32>
    %cst_76 = arith.constant 1.000000e+00 : f32
    %208 = vector.broadcast %cst_76 : f32 to vector<1x1xf32>
    %209 = arith.mulf %208, %149 : vector<1x1xf32>
    %210 = vector.broadcast %209 : vector<1x1xf32> to vector<1x2048xf32>
    %211 = arith.mulf %207, %210 : vector<1x2048xf32>
    %212 = arith.addf %206, %211 : vector<1x2048xf32>
    %c0_77 = arith.constant 0 : index
    %c0_78 = arith.constant 0 : index
    %213 = vector.load %arg2[%c0_77, %c0_78] : memref<1x2048xf32, #tpu.memory_space<vmem>>, vector<1x2048xf32>
    %cst_79 = arith.constant 9.99999974E-6 : f32
    %214 = vector.broadcast %cst_79 : f32 to vector<1x2048xf32>
    %215 = arith.addf %212, %214 : vector<1x2048xf32>
    %216 = math.rsqrt %215 : vector<1x2048xf32>
    %217 = arith.mulf %213, %216 : vector<1x2048xf32>
    %218 = tpu.concatenate %33, %33, %33, %33, %33, %33, %33, %33, %33, %33, %33, %33, %33, %33, %33, %33 in 1 : vector<2x128xf32>, vector<2x128xf32>, vector<2x128xf32>, vector<2x128xf32>, vector<2x128xf32>, vector<2x128xf32>, vector<2x128xf32>, vector<2x128xf32>, vector<2x128xf32>, vector<2x128xf32>, vector<2x128xf32>, vector<2x128xf32>, vector<2x128xf32>, vector<2x128xf32>, vector<2x128xf32>, vector<2x128xf32> -> vector<2x2048xf32>
    %219 = arith.mulf %150, %217 : vector<1x2048xf32>
    %220 = vector.broadcast %219 : vector<1x2048xf32> to vector<2x2048xf32>
    %221 = arith.mulf %218, %220 : vector<2x2048xf32>
    %222 = tpu.concatenate %35, %35, %35, %35, %35, %35, %35, %35, %35, %35, %35, %35, %35, %35, %35, %35 in 1 : vector<2x128xf32>, vector<2x128xf32>, vector<2x128xf32>, vector<2x128xf32>, vector<2x128xf32>, vector<2x128xf32>, vector<2x128xf32>, vector<2x128xf32>, vector<2x128xf32>, vector<2x128xf32>, vector<2x128xf32>, vector<2x128xf32>, vector<2x128xf32>, vector<2x128xf32>, vector<2x128xf32>, vector<2x128xf32> -> vector<2x2048xf32>
    %223 = arith.mulf %151, %217 : vector<1x2048xf32>
    %224 = vector.broadcast %223 : vector<1x2048xf32> to vector<2x2048xf32>
    %225 = arith.mulf %222, %224 : vector<2x2048xf32>
    %226 = arith.addf %221, %225 : vector<2x2048xf32>
    %227 = tpu.concatenate %37, %37, %37, %37, %37, %37, %37, %37, %37, %37, %37, %37, %37, %37, %37, %37 in 1 : vector<2x128xf32>, vector<2x128xf32>, vector<2x128xf32>, vector<2x128xf32>, vector<2x128xf32>, vector<2x128xf32>, vector<2x128xf32>, vector<2x128xf32>, vector<2x128xf32>, vector<2x128xf32>, vector<2x128xf32>, vector<2x128xf32>, vector<2x128xf32>, vector<2x128xf32>, vector<2x128xf32>, vector<2x128xf32> -> vector<2x2048xf32>
    %228 = arith.mulf %152, %217 : vector<1x2048xf32>
    %229 = vector.broadcast %228 : vector<1x2048xf32> to vector<2x2048xf32>
    %230 = arith.mulf %227, %229 : vector<2x2048xf32>
    %231 = arith.addf %226, %230 : vector<2x2048xf32>
    %232 = tpu.concatenate %39, %39, %39, %39, %39, %39, %39, %39, %39, %39, %39, %39, %39, %39, %39, %39 in 1 : vector<2x128xf32>, vector<2x128xf32>, vector<2x128xf32>, vector<2x128xf32>, vector<2x128xf32>, vector<2x128xf32>, vector<2x128xf32>, vector<2x128xf32>, vector<2x128xf32>, vector<2x128xf32>, vector<2x128xf32>, vector<2x128xf32>, vector<2x128xf32>, vector<2x128xf32>, vector<2x128xf32>, vector<2x128xf32> -> vector<2x2048xf32>
    %233 = arith.mulf %153, %217 : vector<1x2048xf32>
    %234 = vector.broadcast %233 : vector<1x2048xf32> to vector<2x2048xf32>
    %235 = arith.mulf %232, %234 : vector<2x2048xf32>
    %236 = arith.addf %231, %235 : vector<2x2048xf32>
    %c0_80 = arith.constant 0 : index
    %c0_81 = arith.constant 0 : index
    %237 = vector.load %arg3[%c0_80, %c0_81] : memref<1x2048xf32, #tpu.memory_space<vmem>>, vector<1x2048xf32>
    %238 = vector.broadcast %237 : vector<1x2048xf32> to vector<2x2048xf32>
    %239 = arith.addf %236, %238 : vector<2x2048xf32>
    %cst_82 = arith.constant 0.000000e+00 : f32
    %240 = vector.broadcast %cst_82 : f32 to vector<2x2048xf32>
    %241 = arith.maximumf %239, %240 : vector<2x2048xf32>
    %c0_83 = arith.constant 0 : index
    %c0_84 = arith.constant 0 : index
    %242 = vector.load %arg4[%c0_83, %c0_84] : memref<4x2048xf32, #tpu.memory_space<vmem>>, vector<4x2048xf32>
    %cst_85 = arith.constant dense<0.000000e+00> : vector<2x4xf32>
    %243 = tpu.matmul %241, %242, %cst_85 {dimension_numbers = #tpu.dot_dimension_numbers<[1], [1], [0], [0], [0, 0, 1, 0], [], []>} : vector<2x2048xf32>, vector<4x2048xf32>, vector<2x4xf32> -> vector<2x4xf32>
    %c0_86 = arith.constant 0 : index
    %c0_87 = arith.constant 0 : index
    %244 = vector.load %arg5[%c0_86, %c0_87] : memref<1x4xf32, #tpu.memory_space<vmem>>, vector<1x4xf32>
    %245 = vector.broadcast %244 : vector<1x4xf32> to vector<2x4xf32>
    %246 = arith.addf %243, %245 : vector<2x4xf32>
    %c0_88 = arith.constant 0 : index
    %c0_89 = arith.constant 0 : index
    %247 = vector.load %arg6[%c0_88, %c0_89] : memref<2x4xf32, #tpu.memory_space<vmem>>, vector<2x4xf32>
    tpu.vector_store %arg6[%c0_88, %c0_89], %246 {strides = array<i32>} : memref<2x4xf32, #tpu.memory_space<vmem>>, vector<2x4xf32>,
    return
  }
}

</mosaic_0001>

<llo_original>
// kernel: tpu_custom_call.1
$region0: #{tpu_custom_call.1}
  #allocation0 [shape = 'u32[]', space=smem, size = 0x4, offset = 0x4, fixed_abs, tag = 'smem constant byte address 0x4 - core index']
  #allocation1 [shape = 'u32[144,128]{1,0:T(1,128)}', space=vmem, size = 0x12000, scoped, tag = 'internal scratch']
  %s0 = inlined_call_operand.hbm [shape: f32[4,2,128], index: 0, kind: input, shape index: {}]
  %s1 = inlined_call_operand.hbm [shape: f32[4,2048], index: 1, kind: input, shape index: {}]
  %s2 = inlined_call_operand.hbm [shape: f32[1,2048], index: 2, kind: input, shape index: {}]
  %s3 = inlined_call_operand.hbm [shape: f32[1,2048], index: 3, kind: input, shape index: {}]
  %s4 = inlined_call_operand.hbm [shape: f32[4,2048], index: 4, kind: input, shape index: {}]
  %s5 = inlined_call_operand.vmem [shape: f32[1,4], index: 5, kind: input, shape index: {}]
  %s6 = inlined_call_operand.hbm [shape: f32[2,4], index: 6, kind: output, shape index: {}]
  %s7 = sld [smem:[#allocation0]]
  $region54: #{tpu_custom_call.1} parent=0
    _
  %s9 = ssub.s32 1, %s7
  %s10 = scalar_select 0, %s9, %s7
  $region1: #{tpu_custom_call.1} parent=0
    #allocation2 [shape = 'u8[4096]{0}', space=vmem, size = 0x1000, scoped, tag = 'input window, operand 0, single buffered']
    #allocation3 [shape = 's32[1]{0}', space=sflag, size = 0x4, scoped, tag = 'scoped memory for tpu_custom_call.1']
    #allocation4 [shape = 's32[1]{0}', space=sflag, size = 0x4, scoped, tag = 'scoped memory for tpu_custom_call.1']
    #allocation5 [shape = 'u8[32768]{0}', space=vmem, size = 0x8000, scoped, tag = 'input window, operand 1, single buffered']
    #allocation6 [shape = 's32[1]{0}', space=sflag, size = 0x4, scoped, tag = 'scoped memory for tpu_custom_call.1']
    #allocation7 [shape = 'u8[8192]{0}', space=vmem, size = 0x2000, scoped, tag = 'input window, operand 2, single buffered']
    #allocation8 [shape = 'u8[8192]{0}', space=vmem, size = 0x2000, scoped, tag = 'input window, operand 3, single buffered']
    #allocation9 [shape = 's32[1]{0}', space=sflag, size = 0x4, scoped, tag = 'scoped memory for tpu_custom_call.1']
    #allocation10 [shape = 'u8[32768]{0}', space=vmem, size = 0x8000, scoped, tag = 'input window, operand 4, single buffered']
    #allocation11 [shape = 'u8[1024]{0}', space=vmem, size = 0x400, scoped, tag = 'output window, operand 0, single buffered']
    %11 = vsyncpa [#allocation3], 0
    %12 = vsyncpa [#allocation6], 0
    %13 = vsyncpa [#allocation9], 0
    %14 = vsyncpa [#allocation4], 0
    // Predicated region
    $region2: #{tpu_custom_call.1} parent=1 // pred_check
      _
    $region3: #{tpu_custom_call.1} parent=1 // pred_check_branch
      %16 = sbr.rel (0) target = $region5
    $region4: #{tpu_custom_call.1} parent=1 // pred_region
      %s18 = ssub.s32 128, 128
      %19 = vsyncadd [#allocation3], %s18
      %s20 = sshll.u32 [#allocation2], 4
      %s21 = int_to_ptr.vmem [resolvable:$true] %s20
      %26 = dma.hbm_to_vmem [thread:$0]  %s0, 128, %s21, [#allocation3], 32, 32, 2
    $region5: #{tpu_custom_call.1} parent=1 // pred_fallthru
      _
    // Predicated region
    $region6: #{tpu_custom_call.1} parent=1 // pred_check
      _
    $region7: #{tpu_custom_call.1} parent=1 // pred_check_branch
      %28 = sbr.rel (0) target = $region9
    $region8: #{tpu_custom_call.1} parent=1 // pred_region
      %s30 = ssub.s32 1024, 1024
      %31 = vsyncadd [#allocation6], %s30
      %s33 = sshll.u32 [#allocation5], 4
      %s34 = int_to_ptr.vmem [resolvable:$true] %s33
      %36 = dma.hbm_to_vmem [thread:$0]  %s1, 1024, %s34, [#allocation6]
    $region9: #{tpu_custom_call.1} parent=1 // pred_fallthru
      _
    // Predicated region
    $region10: #{tpu_custom_call.1} parent=1 // pred_check
      _
    $region11: #{tpu_custom_call.1} parent=1 // pred_check_branch
      %38 = sbr.rel (0) target = $region13
    $region12: #{tpu_custom_call.1} parent=1 // pred_region
      %s40 = ssub.s32 256, 256
      %41 = vsyncadd [#allocation6], %s40
      %s43 = sshll.u32 [#allocation7], 4
      %s44 = int_to_ptr.vmem [resolvable:$true] %s43
      %46 = dma.hbm_to_vmem [thread:$0]  %s2, 256, %s44, [#allocation6]
    $region13: #{tpu_custom_call.1} parent=1 // pred_fallthru
      _
    // Predicated region
    $region14: #{tpu_custom_call.1} parent=1 // pred_check
      _
    $region15: #{tpu_custom_call.1} parent=1 // pred_check_branch
      %48 = sbr.rel (0) target = $region17
    $region16: #{tpu_custom_call.1} parent=1 // pred_region
      %s50 = ssub.s32 256, 256
      %51 = vsyncadd [#allocation9], %s50
      %s53 = sshll.u32 [#allocation8], 4
      %s54 = int_to_ptr.vmem [resolvable:$true] %s53
      %56 = dma.hbm_to_vmem [thread:$0]  %s3, 256, %s54, [#allocation9]
    $region17: #{tpu_custom_call.1} parent=1 // pred_fallthru
      _
    // Predicated region
    $region18: #{tpu_custom_call.1} parent=1 // pred_check
      _
    $region19: #{tpu_custom_call.1} parent=1 // pred_check_branch
      %58 = sbr.rel (0) target = $region21
    $region20: #{tpu_custom_call.1} parent=1 // pred_region
      %s60 = ssub.s32 1024, 1024
      %61 = vsyncadd [#allocation9], %s60
      %s63 = sshll.u32 [#allocation10], 4
      %s64 = int_to_ptr.vmem [resolvable:$true] %s63
      %66 = dma.hbm_to_vmem [thread:$0]  %s4, 1024, %s64, [#allocation9]
    $region21: #{tpu_custom_call.1} parent=1 // pred_fallthru
      _
    // Predicated region
    $region22: #{tpu_custom_call.1} parent=1 // pred_check
      _
    $region23: #{tpu_custom_call.1} parent=1 // pred_check_branch
      %68 = sbr.rel (0) target = $region25
    $region24: #{tpu_custom_call.1} parent=1 // pred_region
      _
    $region25: #{tpu_custom_call.1} parent=1 // pred_fallthru
      _
    // Predicated region
    $region26: #{tpu_custom_call.1} parent=1 // pred_check
      _
    $region27: #{tpu_custom_call.1} parent=1 // pred_check_branch
      %70 = sbr.rel (0) target = $region29
    $region28: #{tpu_custom_call.1} parent=1 // pred_region
      %71 = dma.done [#allocation3], 128
    $region29: #{tpu_custom_call.1} parent=1 // pred_fallthru
      _
    // Predicated region
    $region30: #{tpu_custom_call.1} parent=1 // pred_check
      _
    $region31: #{tpu_custom_call.1} parent=1 // pred_check_branch
      %73 = sbr.rel (0) target = $region33
    $region32: #{tpu_custom_call.1} parent=1 // pred_region
      %74 = dma.done [#allocation6], 1024
    $region33: #{tpu_custom_call.1} parent=1 // pred_fallthru
      _
    // Predicated region
    $region34: #{tpu_custom_call.1} parent=1 // pred_check
      _
    $region35: #{tpu_custom_call.1} parent=1 // pred_check_branch
      %76 = sbr.rel (0) target = $region37
    $region36: #{tpu_custom_call.1} parent=1 // pred_region
      %77 = dma.done [#allocation6], 256
    $region37: #{tpu_custom_call.1} parent=1 // pred_fallthru
      _
    // Predicated region
    $region38: #{tpu_custom_call.1} parent=1 // pred_check
      _
    $region39: #{tpu_custom_call.1} parent=1 // pred_check_branch
      %79 = sbr.rel (0) target = $region41
    $region40: #{tpu_custom_call.1} parent=1 // pred_region
      %80 = dma.done [#allocation9], 256
    $region41: #{tpu_custom_call.1} parent=1 // pred_fallthru
      _
    // Predicated region
    $region42: #{tpu_custom_call.1} parent=1 // pred_check
      _
    $region43: #{tpu_custom_call.1} parent=1 // pred_check_branch
      %82 = sbr.rel (0) target = $region45
    $region44: #{tpu_custom_call.1} parent=1 // pred_region
      %83 = dma.done [#allocation9], 1024
    $region45: #{tpu_custom_call.1} parent=1 // pred_fallthru
      _
    %v84 = vld [vmem:[#allocation2] sm:$0x3]
    %s85 = scalar_lea.vmem [#allocation2], 2
    %v86 = vld [vmem:[%s85] sm:$0x3]
    %s87 = scalar_lea.vmem [#allocation2], 4
    %v88 = vld [vmem:[%s87] sm:$0x3]
    %s89 = scalar_lea.vmem [#allocation2], 6
    %v90 = vld [vmem:[%s89] sm:$0x3]
    %vm91 = vcmask 1041408
    %v92 = vsel %vm91, %v84, 0.0
    %93 = vadd.xlane.f32.xlu0 %v92
    %v94 = vpop.xlane.xlu0 %93
    %v95 = vsel %vm91, %v94, 0.0
    %v96 = vrot.slane %v95, 4
    %v97 = vadd.f32 %v95, %v96
    %v98 = vrot.slane %v97, 2
    %v99 = vadd.f32 %v97, %v98
    %v100 = vrot.slane %v99, 1
    %v101 = vadd.f32 %v99, %v100
    %v102 = vmul.f32 %v101, 0.0078125
    %v103 = vsel %vm91, %v86, 0.0
    %104 = vadd.xlane.f32.xlu0 %v103
    %v105 = vpop.xlane.xlu0 %104
    %v106 = vsel %vm91, %v105, 0.0
    %v107 = vrot.slane %v106, 4
    %v108 = vadd.f32 %v106, %v107
    %v109 = vrot.slane %v108, 2
    %v110 = vadd.f32 %v108, %v109
    %v111 = vrot.slane %v110, 1
    %v112 = vadd.f32 %v110, %v111
    %v113 = vmul.f32 %v112, 0.0078125
    %v114 = vsel %vm91, %v88, 0.0
    %115 = vadd.xlane.f32.xlu0 %v114
    %v116 = vpop.xlane.xlu0 %115
    %v117 = vsel %vm91, %v116, 0.0
    %v118 = vrot.slane %v117, 4
    %v119 = vadd.f32 %v117, %v118
    %v120 = vrot.slane %v119, 2
    %v121 = vadd.f32 %v119, %v120
    %v122 = vrot.slane %v121, 1
    %v123 = vadd.f32 %v121, %v122
    %v124 = vmul.f32 %v123, 0.0078125
    %v125 = vsel %vm91, %v90, 0.0
    %126 = vadd.xlane.f32.xlu0 %v125
    %v127 = vpop.xlane.xlu0 %126
    %v128 = vsel %vm91, %v127, 0.0
    %v129 = vrot.slane %v128, 4
    %v130 = vadd.f32 %v128, %v129
    %v131 = vrot.slane %v130, 2
    %v132 = vadd.f32 %v130, %v131
    %v133 = vrot.slane %v132, 1
    %v134 = vadd.f32 %v132, %v133
    %v135 = vmul.f32 %v134, 0.0078125
    %v136 = vsub.f32 %v84, %v102
    %v137 = vsub.f32 %v86, %v113
    %v138 = vsub.f32 %v88, %v124
    %v139 = vsub.f32 %v90, %v135
    %v140 = vmul.f32 %v136, %v136
    %v141 = vsel %vm91, %v140, 0.0
    %142 = vadd.xlane.f32.xlu0 %v141
    %v143 = vpop.xlane.xlu0 %142
    %v144 = vsel %vm91, %v143, 0.0
    %v145 = vrot.slane %v144, 4
    %v146 = vadd.f32 %v144, %v145
    %v147 = vrot.slane %v146, 2
    %v148 = vadd.f32 %v146, %v147
    %v149 = vrot.slane %v148, 1
    %v150 = vadd.f32 %v148, %v149
    %v151 = vmul.f32 %v150, 0.0078125
    %v152 = vmul.f32 %v102, %v102
    %v153 = vsub.f32 %v151, %v152
    %v154 = vmul.f32 %v136, %v137
    %v155 = vsel %vm91, %v154, 0.0
    %156 = vadd.xlane.f32.xlu0 %v155
    %v157 = vpop.xlane.xlu0 %156
    %v158 = vsel %vm91, %v157, 0.0
    %v159 = vrot.slane %v158, 4
    %v160 = vadd.f32 %v158, %v159
    %v161 = vrot.slane %v160, 2
    %v162 = vadd.f32 %v160, %v161
    %v163 = vrot.slane %v162, 1
    %v164 = vadd.f32 %v162, %v163
    %v165 = vmul.f32 %v164, 0.0078125
    %v166 = vmul.f32 %v102, %v113
    %v167 = vsub.f32 %v165, %v166
    %v168 = vmul.f32 %v136, %v138
    %v169 = vsel %vm91, %v168, 0.0
    %170 = vadd.xlane.f32.xlu0 %v169
    %v171 = vpop.xlane.xlu0 %170
    %v172 = vsel %vm91, %v171, 0.0
    %v173 = vrot.slane %v172, 4
    %v174 = vadd.f32 %v172, %v173
    %v175 = vrot.slane %v174, 2
    %v176 = vadd.f32 %v174, %v175
    %v177 = vrot.slane %v176, 1
    %v178 = vadd.f32 %v176, %v177
    %v179 = vmul.f32 %v178, 0.0078125
    %v180 = vmul.f32 %v102, %v124
    %v181 = vsub.f32 %v179, %v180
    %v182 = vmul.f32 %v136, %v139
    %v183 = vsel %vm91, %v182, 0.0
    %184 = vadd.xlane.f32.xlu0 %v183
    %v185 = vpop.xlane.xlu0 %184
    %v186 = vsel %vm91, %v185, 0.0
    %v187 = vrot.slane %v186, 4
    %v188 = vadd.f32 %v186, %v187
    %v189 = vrot.slane %v188, 2
    %v190 = vadd.f32 %v188, %v189
    %v191 = vrot.slane %v190, 1
    %v192 = vadd.f32 %v190, %v191
    %v193 = vmul.f32 %v192, 0.0078125
    %v194 = vmul.f32 %v102, %v135
    %v195 = vsub.f32 %v193, %v194
    %v196 = vmul.f32 %v137, %v137
    %v197 = vsel %vm91, %v196, 0.0
    %198 = vadd.xlane.f32.xlu0 %v197
    %v199 = vpop.xlane.xlu0 %198
    %v200 = vsel %vm91, %v199, 0.0
    %v201 = vrot.slane %v200, 4
    %v202 = vadd.f32 %v200, %v201
    %v203 = vrot.slane %v202, 2
    %v204 = vadd.f32 %v202, %v203
    %v205 = vrot.slane %v204, 1
    %v206 = vadd.f32 %v204, %v205
    %v207 = vmul.f32 %v206, 0.0078125
    %v208 = vmul.f32 %v113, %v113
    %v209 = vsub.f32 %v207, %v208
    %v210 = vmul.f32 %v137, %v138
    %v211 = vsel %vm91, %v210, 0.0
    %212 = vadd.xlane.f32.xlu0 %v211
    %v213 = vpop.xlane.xlu0 %212
    %v214 = vsel %vm91, %v213, 0.0
    %v215 = vrot.slane %v214, 4
    %v216 = vadd.f32 %v214, %v215
    %v217 = vrot.slane %v216, 2
    %v218 = vadd.f32 %v216, %v217
    %v219 = vrot.slane %v218, 1
    %v220 = vadd.f32 %v218, %v219
    %v221 = vmul.f32 %v220, 0.0078125
    %v222 = vmul.f32 %v113, %v124
    %v223 = vsub.f32 %v221, %v222
    %v224 = vmul.f32 %v137, %v139
    %v225 = vsel %vm91, %v224, 0.0
    %226 = vadd.xlane.f32.xlu0 %v225
    %v227 = vpop.xlane.xlu0 %226
    %v228 = vsel %vm91, %v227, 0.0
    %v229 = vrot.slane %v228, 4
    %v230 = vadd.f32 %v228, %v229
    %v231 = vrot.slane %v230, 2
    %v232 = vadd.f32 %v230, %v231
    %v233 = vrot.slane %v232, 1
    %v234 = vadd.f32 %v232, %v233
    %v235 = vmul.f32 %v234, 0.0078125
    %v236 = vmul.f32 %v113, %v135
    %v237 = vsub.f32 %v235, %v236
    %v238 = vmul.f32 %v138, %v138
    %v239 = vsel %vm91, %v238, 0.0
    %240 = vadd.xlane.f32.xlu0 %v239
    %v241 = vpop.xlane.xlu0 %240
    %v242 = vsel %vm91, %v241, 0.0
    %v243 = vrot.slane %v242, 4
    %v244 = vadd.f32 %v242, %v243
    %v245 = vrot.slane %v244, 2
    %v246 = vadd.f32 %v244, %v245
    %v247 = vrot.slane %v246, 1
    %v248 = vadd.f32 %v246, %v247
    %v249 = vmul.f32 %v248, 0.0078125
    %v250 = vmul.f32 %v124, %v124
    %v251 = vsub.f32 %v249, %v250
    %v252 = vmul.f32 %v138, %v139
    %v253 = vsel %vm91, %v252, 0.0
    %254 = vadd.xlane.f32.xlu0 %v253
    %v255 = vpop.xlane.xlu0 %254
    %v256 = vsel %vm91, %v255, 0.0
    %v257 = vrot.slane %v256, 4
    %v258 = vadd.f32 %v256, %v257
    %v259 = vrot.slane %v258, 2
    %v260 = vadd.f32 %v258, %v259
    %v261 = vrot.slane %v260, 1
    %v262 = vadd.f32 %v260, %v261
    %v263 = vmul.f32 %v262, 0.0078125
    %v264 = vmul.f32 %v124, %v135
    %v265 = vsub.f32 %v263, %v264
    %v266 = vmul.f32 %v139, %v139
    %v267 = vsel %vm91, %v266, 0.0
    %268 = vadd.xlane.f32.xlu0 %v267
    %v269 = vpop.xlane.xlu0 %268
    %v270 = vsel %vm91, %v269, 0.0
    %v271 = vrot.slane %v270, 4
    %v272 = vadd.f32 %v270, %v271
    %v273 = vrot.slane %v272, 2
    %v274 = vadd.f32 %v272, %v273
    %v275 = vrot.slane %v274, 1
    %v276 = vadd.f32 %v274, %v275
    %v277 = vmul.f32 %v276, 0.0078125
    %v278 = vmul.f32 %v135, %v135
    %v279 = vsub.f32 %v277, %v278
    %v280 = vld [vmem:[#allocation5] ss:$4 sm:$0xff]
    %s281 = scalar_lea.vmem [#allocation5], 32
    %v282 = vld [vmem:[%s281] ss:$4 sm:$0xff]
    %s283 = scalar_lea.vmem [#allocation5], 1
    %v284 = vld [vmem:[%s283] ss:$4 sm:$0xff]
    %s285 = scalar_lea.vmem [#allocation5], 33
    %v286 = vld [vmem:[%s285] ss:$4 sm:$0xff]
    %s287 = scalar_lea.vmem [#allocation5], 2
    %v288 = vld [vmem:[%s287] ss:$4 sm:$0xff]
    %s289 = scalar_lea.vmem [#allocation5], 34
    %v290 = vld [vmem:[%s289] ss:$4 sm:$0xff]
    %s291 = scalar_lea.vmem [#allocation5], 3
    %v292 = vld [vmem:[%s291] ss:$4 sm:$0xff]
    %s293 = scalar_lea.vmem [#allocation5], 35
    %v294 = vld [vmem:[%s293] ss:$4 sm:$0xff]
    %v295 = vmul.f32 %v280, %v280
    %v296 = vmul.f32 %v282, %v282
    %v297 = vmul.f32 %v295, %v153
    %v298 = vmul.f32 %v296, %v153
    %v299 = vmul.f32 %v280, %v284
    %v300 = vmul.f32 %v282, %v286
    %v301 = vmul.f32 %v167, 2.0
    %v302 = vmul.f32 %v299, %v301
    %v303 = vmul.f32 %v300, %v301
    %v304 = vadd.f32 %v297, %v302
    %v305 = vadd.f32 %v298, %v303
    %v306 = vmul.f32 %v280, %v288
    %v307 = vmul.f32 %v282, %v290
    %v308 = vmul.f32 %v181, 2.0
    %v309 = vmul.f32 %v306, %v308
    %v310 = vmul.f32 %v307, %v308
    %v311 = vadd.f32 %v304, %v309
    %v312 = vadd.f32 %v305, %v310
    %v313 = vmul.f32 %v280, %v292
    %v314 = vmul.f32 %v282, %v294
    %v315 = vmul.f32 %v195, 2.0
    %v316 = vmul.f32 %v313, %v315
    %v317 = vmul.f32 %v314, %v315
    %v318 = vadd.f32 %v311, %v316
    %v319 = vadd.f32 %v312, %v317
    %v320 = vmul.f32 %v284, %v284
    %v321 = vmul.f32 %v286, %v286
    %v322 = vmul.f32 %v320, %v209
    %v323 = vmul.f32 %v321, %v209
    %v324 = vadd.f32 %v318, %v322
    %v325 = vadd.f32 %v319, %v323
    %v326 = vmul.f32 %v284, %v288
    %v327 = vmul.f32 %v286, %v290
    %v328 = vmul.f32 %v223, 2.0
    %v329 = vmul.f32 %v326, %v328
    %v330 = vmul.f32 %v327, %v328
    %v331 = vadd.f32 %v324, %v329
    %v332 = vadd.f32 %v325, %v330
    %v333 = vmul.f32 %v284, %v292
    %v334 = vmul.f32 %v286, %v294
    %v335 = vmul.f32 %v237, 2.0
    %v336 = vmul.f32 %v333, %v335
    %v337 = vmul.f32 %v334, %v335
    %v338 = vadd.f32 %v331, %v336
    %v339 = vadd.f32 %v332, %v337
    %v340 = vmul.f32 %v288, %v288
    %v341 = vmul.f32 %v290, %v290
    %v342 = vmul.f32 %v340, %v251
    %v343 = vmul.f32 %v341, %v251
    %v344 = vadd.f32 %v338, %v342
    %v345 = vadd.f32 %v339, %v343
    %v346 = vmul.f32 %v288, %v292
    %v347 = vmul.f32 %v290, %v294
    %v348 = vmul.f32 %v265, 2.0
    %v349 = vmul.f32 %v346, %v348
    %v350 = vmul.f32 %v347, %v348
    %v351 = vadd.f32 %v344, %v349
    %v352 = vadd.f32 %v345, %v350
    %v353 = vmul.f32 %v292, %v292
    %v354 = vmul.f32 %v294, %v294
    %v355 = vmul.f32 %v353, %v279
    %v356 = vmul.f32 %v354, %v279
    %v357 = vadd.f32 %v351, %v355
    %v358 = vadd.f32 %v352, %v356
    %v359 = vld [vmem:[#allocation7] sm:$0xff]
    %v360 = vld [vmem:[#allocation7 + $0x8] sm:$0xff]
    %v361 = vadd.f32 %v357, 1e-05
    %v362 = vadd.f32 %v358, 1e-05
    %v363 = vrsqrt.pop %v361
    %v364 = vrsqrt.pop %v362
    %v365 = vmul.f32 %v359, %v363
    %v366 = vmul.f32 %v360, %v364
    %v367 = vmul.f32 %v280, %v365
    %v368 = vmul.f32 %v282, %v366
    %v371 = vlaneseq
    %v372 = vshrl.u32 %v371, 7
    %v373 = vsub.s32 0, %v372
    %v374 = vrot.slane %v367, %v373
    %v375 = vlaneseq
    %v376 = vshrl.u32 %v375, 7
    %v377 = vsub.s32 1, %v376
    %v378 = vrot.slane %v367, %v377
    %v379 = vlaneseq
    %v380 = vshrl.u32 %v379, 7
    %v381 = vsub.s32 2, %v380
    %v382 = vrot.slane %v367, %v381
    %v383 = vlaneseq
    %v384 = vshrl.u32 %v383, 7
    %v385 = vsub.s32 3, %v384
    %v386 = vrot.slane %v367, %v385
    %v387 = vlaneseq
    %v388 = vshrl.u32 %v387, 7
    %v389 = vsub.s32 4, %v388
    %v390 = vrot.slane %v367, %v389
    %v391 = vlaneseq
    %v392 = vshrl.u32 %v391, 7
    %v393 = vsub.s32 5, %v392
    %v394 = vrot.slane %v367, %v393
    %v395 = vlaneseq
    %v396 = vshrl.u32 %v395, 7
    %v397 = vsub.s32 6, %v396
    %v398 = vrot.slane %v367, %v397
    %v399 = vlaneseq
    %v400 = vshrl.u32 %v399, 7
    %v401 = vsub.s32 7, %v400
    %v402 = vrot.slane %v367, %v401
    %v403 = vlaneseq
    %v404 = vshrl.u32 %v403, 7
    %v405 = vsub.s32 0, %v404
    %v406 = vrot.slane %v368, %v405
    %v407 = vlaneseq
    %v408 = vshrl.u32 %v407, 7
    %v409 = vsub.s32 1, %v408
    %v410 = vrot.slane %v368, %v409
    %v411 = vlaneseq
    %v412 = vshrl.u32 %v411, 7
    %v413 = vsub.s32 2, %v412
    %v414 = vrot.slane %v368, %v413
    %v415 = vlaneseq
    %v416 = vshrl.u32 %v415, 7
    %v417 = vsub.s32 3, %v416
    %v418 = vrot.slane %v368, %v417
    %v419 = vlaneseq
    %v420 = vshrl.u32 %v419, 7
    %v421 = vsub.s32 4, %v420
    %v422 = vrot.slane %v368, %v421
    %v423 = vlaneseq
    %v424 = vshrl.u32 %v423, 7
    %v425 = vsub.s32 5, %v424
    %v426 = vrot.slane %v368, %v425
    %v427 = vlaneseq
    %v428 = vshrl.u32 %v427, 7
    %v429 = vsub.s32 6, %v428
    %v430 = vrot.slane %v368, %v429
    %v431 = vlaneseq
    %v432 = vshrl.u32 %v431, 7
    %v433 = vsub.s32 7, %v432
    %v434 = vrot.slane %v368, %v433
    %v451 = vmul.f32 %v136, %v374
    %v452 = vmul.f32 %v136, %v378
    %v453 = vmul.f32 %v136, %v382
    %v454 = vmul.f32 %v136, %v386
    %v455 = vmul.f32 %v136, %v390
    %v456 = vmul.f32 %v136, %v394
    %v457 = vmul.f32 %v136, %v398
    %v458 = vmul.f32 %v136, %v402
    %v459 = vmul.f32 %v136, %v406
    %v460 = vmul.f32 %v136, %v410
    %v461 = vmul.f32 %v136, %v414
    %v462 = vmul.f32 %v136, %v418
    %v463 = vmul.f32 %v136, %v422
    %v464 = vmul.f32 %v136, %v426
    %v465 = vmul.f32 %v136, %v430
    %v466 = vmul.f32 %v136, %v434
    %v467 = vmul.f32 %v284, %v365
    %v468 = vmul.f32 %v286, %v366
    %v471 = vlaneseq
    %v472 = vshrl.u32 %v471, 7
    %v473 = vsub.s32 0, %v472
    %v474 = vrot.slane %v467, %v473
    %v475 = vlaneseq
    %v476 = vshrl.u32 %v475, 7
    %v477 = vsub.s32 1, %v476
    %v478 = vrot.slane %v467, %v477
    %v479 = vlaneseq
    %v480 = vshrl.u32 %v479, 7
    %v481 = vsub.s32 2, %v480
    %v482 = vrot.slane %v467, %v481
    %v483 = vlaneseq
    %v484 = vshrl.u32 %v483, 7
    %v485 = vsub.s32 3, %v484
    %v486 = vrot.slane %v467, %v485
    %v487 = vlaneseq
    %v488 = vshrl.u32 %v487, 7
    %v489 = vsub.s32 4, %v488
    %v490 = vrot.slane %v467, %v489
    %v491 = vlaneseq
    %v492 = vshrl.u32 %v491, 7
    %v493 = vsub.s32 5, %v492
    %v494 = vrot.slane %v467, %v493
    %v495 = vlaneseq
    %v496 = vshrl.u32 %v495, 7
    %v497 = vsub.s32 6, %v496
    %v498 = vrot.slane %v467, %v497
    %v499 = vlaneseq
    %v500 = vshrl.u32 %v499, 7
    %v501 = vsub.s32 7, %v500
    %v502 = vrot.slane %v467, %v501
    %v503 = vlaneseq
    %v504 = vshrl.u32 %v503, 7
    %v505 = vsub.s32 0, %v504
    %v506 = vrot.slane %v468, %v505
    %v507 = vlaneseq
    %v508 = vshrl.u32 %v507, 7
    %v509 = vsub.s32 1, %v508
    %v510 = vrot.slane %v468, %v509
    %v511 = vlaneseq
    %v512 = vshrl.u32 %v511, 7
    %v513 = vsub.s32 2, %v512
    %v514 = vrot.slane %v468, %v513
    %v515 = vlaneseq
    %v516 = vshrl.u32 %v515, 7
    %v517 = vsub.s32 3, %v516
    %v518 = vrot.slane %v468, %v517
    %v519 = vlaneseq
    %v520 = vshrl.u32 %v519, 7
    %v521 = vsub.s32 4, %v520
    %v522 = vrot.slane %v468, %v521
    %v523 = vlaneseq
    %v524 = vshrl.u32 %v523, 7
    %v525 = vsub.s32 5, %v524
    %v526 = vrot.slane %v468, %v525
    %v527 = vlaneseq
    %v528 = vshrl.u32 %v527, 7
    %v529 = vsub.s32 6, %v528
    %v530 = vrot.slane %v468, %v529
    %v531 = vlaneseq
    %v532 = vshrl.u32 %v531, 7
    %v533 = vsub.s32 7, %v532
    %v534 = vrot.slane %v468, %v533
    %v551 = vmul.f32 %v137, %v474
    %v552 = vmul.f32 %v137, %v478
    %v553 = vmul.f32 %v137, %v482
    %v554 = vmul.f32 %v137, %v486
    %v555 = vmul.f32 %v137, %v490
    %v556 = vmul.f32 %v137, %v494
    %v557 = vmul.f32 %v137, %v498
    %v558 = vmul.f32 %v137, %v502
    %v559 = vmul.f32 %v137, %v506
    %v560 = vmul.f32 %v137, %v510
    %v561 = vmul.f32 %v137, %v514
    %v562 = vmul.f32 %v137, %v518
    %v563 = vmul.f32 %v137, %v522
    %v564 = vmul.f32 %v137, %v526
    %v565 = vmul.f32 %v137, %v530
    %v566 = vmul.f32 %v137, %v534
    %v567 = vadd.f32 %v451, %v551
    %v568 = vadd.f32 %v452, %v552
    %v569 = vadd.f32 %v453, %v553
    %v570 = vadd.f32 %v454, %v554
    %v571 = vadd.f32 %v455, %v555
    %v572 = vadd.f32 %v456, %v556
    %v573 = vadd.f32 %v457, %v557
    %v574 = vadd.f32 %v458, %v558
    %v575 = vadd.f32 %v459, %v559
    %v576 = vadd.f32 %v460, %v560
    %v577 = vadd.f32 %v461, %v561
    %v578 = vadd.f32 %v462, %v562
    %v579 = vadd.f32 %v463, %v563
    %v580 = vadd.f32 %v464, %v564
    %v581 = vadd.f32 %v465, %v565
    %v582 = vadd.f32 %v466, %v566
    %v583 = vmul.f32 %v288, %v365
    %v584 = vmul.f32 %v290, %v366
    %v587 = vlaneseq
    %v588 = vshrl.u32 %v587, 7
    %v589 = vsub.s32 0, %v588
    %v590 = vrot.slane %v583, %v589
    %v591 = vlaneseq
    %v592 = vshrl.u32 %v591, 7
    %v593 = vsub.s32 1, %v592
    %v594 = vrot.slane %v583, %v593
    %v595 = vlaneseq
    %v596 = vshrl.u32 %v595, 7
    %v597 = vsub.s32 2, %v596
    %v598 = vrot.slane %v583, %v597
    %v599 = vlaneseq
    %v600 = vshrl.u32 %v599, 7
    %v601 = vsub.s32 3, %v600
    %v602 = vrot.slane %v583, %v601
    %v603 = vlaneseq
    %v604 = vshrl.u32 %v603, 7
    %v605 = vsub.s32 4, %v604
    %v606 = vrot.slane %v583, %v605
    %v607 = vlaneseq
    %v608 = vshrl.u32 %v607, 7
    %v609 = vsub.s32 5, %v608
    %v610 = vrot.slane %v583, %v609
    %v611 = vlaneseq
    %v612 = vshrl.u32 %v611, 7
    %v613 = vsub.s32 6, %v612
    %v614 = vrot.slane %v583, %v613
    %v615 = vlaneseq
    %v616 = vshrl.u32 %v615, 7
    %v617 = vsub.s32 7, %v616
    %v618 = vrot.slane %v583, %v617
    %v619 = vlaneseq
    %v620 = vshrl.u32 %v619, 7
    %v621 = vsub.s32 0, %v620
    %v622 = vrot.slane %v584, %v621
    %v623 = vlaneseq
    %v624 = vshrl.u32 %v623, 7
    %v625 = vsub.s32 1, %v624
    %v626 = vrot.slane %v584, %v625
    %v627 = vlaneseq
    %v628 = vshrl.u32 %v627, 7
    %v629 = vsub.s32 2, %v628
    %v630 = vrot.slane %v584, %v629
    %v631 = vlaneseq
    %v632 = vshrl.u32 %v631, 7
    %v633 = vsub.s32 3, %v632
    %v634 = vrot.slane %v584, %v633
    %v635 = vlaneseq
    %v636 = vshrl.u32 %v635, 7
    %v637 = vsub.s32 4, %v636
    %v638 = vrot.slane %v584, %v637
    %v639 = vlaneseq
    %v640 = vshrl.u32 %v639, 7
    %v641 = vsub.s32 5, %v640
    %v642 = vrot.slane %v584, %v641
    %v643 = vlaneseq
    %v644 = vshrl.u32 %v643, 7
    %v645 = vsub.s32 6, %v644
    %v646 = vrot.slane %v584, %v645
    %v647 = vlaneseq
    %v648 = vshrl.u32 %v647, 7
    %v649 = vsub.s32 7, %v648
    %v650 = vrot.slane %v584, %v649
    %v667 = vmul.f32 %v138, %v590
    %v668 = vmul.f32 %v138, %v594
    %v669 = vmul.f32 %v138, %v598
    %v670 = vmul.f32 %v138, %v602
    %v671 = vmul.f32 %v138, %v606
    %v672 = vmul.f32 %v138, %v610
    %v673 = vmul.f32 %v138, %v614
    %v674 = vmul.f32 %v138, %v618
    %v675 = vmul.f32 %v138, %v622
    %v676 = vmul.f32 %v138, %v626
    %v677 = vmul.f32 %v138, %v630
    %v678 = vmul.f32 %v138, %v634
    %v679 = vmul.f32 %v138, %v638
    %v680 = vmul.f32 %v138, %v642
    %v681 = vmul.f32 %v138, %v646
    %v682 = vmul.f32 %v138, %v650
    %v683 = vadd.f32 %v567, %v667
    %v684 = vadd.f32 %v568, %v668
    %v685 = vadd.f32 %v569, %v669
    %v686 = vadd.f32 %v570, %v670
    %v687 = vadd.f32 %v571, %v671
    %v688 = vadd.f32 %v572, %v672
    %v689 = vadd.f32 %v573, %v673
    %v690 = vadd.f32 %v574, %v674
    %v691 = vadd.f32 %v575, %v675
    %v692 = vadd.f32 %v576, %v676
    %v693 = vadd.f32 %v577, %v677
    %v694 = vadd.f32 %v578, %v678
    %v695 = vadd.f32 %v579, %v679
    %v696 = vadd.f32 %v580, %v680
    %v697 = vadd.f32 %v581, %v681
    %v698 = vadd.f32 %v582, %v682
    %v699 = vmul.f32 %v292, %v365
    %v700 = vmul.f32 %v294, %v366
    %v703 = vlaneseq
    %v704 = vshrl.u32 %v703, 7
    %v705 = vsub.s32 0, %v704
    %v706 = vrot.slane %v699, %v705
    %v707 = vlaneseq
    %v708 = vshrl.u32 %v707, 7
    %v709 = vsub.s32 1, %v708
    %v710 = vrot.slane %v699, %v709
    %v711 = vlaneseq
    %v712 = vshrl.u32 %v711, 7
    %v713 = vsub.s32 2, %v712
    %v714 = vrot.slane %v699, %v713
    %v715 = vlaneseq
    %v716 = vshrl.u32 %v715, 7
    %v717 = vsub.s32 3, %v716
    %v718 = vrot.slane %v699, %v717
    %v719 = vlaneseq
    %v720 = vshrl.u32 %v719, 7
    %v721 = vsub.s32 4, %v720
    %v722 = vrot.slane %v699, %v721
    %v723 = vlaneseq
    %v724 = vshrl.u32 %v723, 7
    %v725 = vsub.s32 5, %v724
    %v726 = vrot.slane %v699, %v725
    %v727 = vlaneseq
    %v728 = vshrl.u32 %v727, 7
    %v729 = vsub.s32 6, %v728
    %v730 = vrot.slane %v699, %v729
    %v731 = vlaneseq
    %v732 = vshrl.u32 %v731, 7
    %v733 = vsub.s32 7, %v732
    %v734 = vrot.slane %v699, %v733
    %v735 = vlaneseq
    %v736 = vshrl.u32 %v735, 7
    %v737 = vsub.s32 0, %v736
    %v738 = vrot.slane %v700, %v737
    %v739 = vlaneseq
    %v740 = vshrl.u32 %v739, 7
    %v741 = vsub.s32 1, %v740
    %v742 = vrot.slane %v700, %v741
    %v743 = vlaneseq
    %v744 = vshrl.u32 %v743, 7
    %v745 = vsub.s32 2, %v744
    %v746 = vrot.slane %v700, %v745
    %v747 = vlaneseq
    %v748 = vshrl.u32 %v747, 7
    %v749 = vsub.s32 3, %v748
    %v750 = vrot.slane %v700, %v749
    %v751 = vlaneseq
    %v752 = vshrl.u32 %v751, 7
    %v753 = vsub.s32 4, %v752
    %v754 = vrot.slane %v700, %v753
    %v755 = vlaneseq
    %v756 = vshrl.u32 %v755, 7
    %v757 = vsub.s32 5, %v756
    %v758 = vrot.slane %v700, %v757
    %v759 = vlaneseq
    %v760 = vshrl.u32 %v759, 7
    %v761 = vsub.s32 6, %v760
    %v762 = vrot.slane %v700, %v761
    %v763 = vlaneseq
    %v764 = vshrl.u32 %v763, 7
    %v765 = vsub.s32 7, %v764
    %v766 = vrot.slane %v700, %v765
    %v783 = vmul.f32 %v139, %v706
    %v784 = vmul.f32 %v139, %v710
    %v785 = vmul.f32 %v139, %v714
    %v786 = vmul.f32 %v139, %v718
    %v787 = vmul.f32 %v139, %v722
    %v788 = vmul.f32 %v139, %v726
    %v789 = vmul.f32 %v139, %v730
    %v790 = vmul.f32 %v139, %v734
    %v791 = vmul.f32 %v139, %v738
    %v792 = vmul.f32 %v139, %v742
    %v793 = vmul.f32 %v139, %v746
    %v794 = vmul.f32 %v139, %v750
    %v795 = vmul.f32 %v139, %v754
    %v796 = vmul.f32 %v139, %v758
    %v797 = vmul.f32 %v139, %v762
    %v798 = vmul.f32 %v139, %v766
    %v799 = vadd.f32 %v683, %v783
    %v800 = vadd.f32 %v684, %v784
    %v801 = vadd.f32 %v685, %v785
    %v802 = vadd.f32 %v686, %v786
    %v803 = vadd.f32 %v687, %v787
    %v804 = vadd.f32 %v688, %v788
    %v805 = vadd.f32 %v689, %v789
    %v806 = vadd.f32 %v690, %v790
    %v807 = vadd.f32 %v691, %v791
    %v808 = vadd.f32 %v692, %v792
    %v809 = vadd.f32 %v693, %v793
    %v810 = vadd.f32 %v694, %v794
    %v811 = vadd.f32 %v695, %v795
    %v812 = vadd.f32 %v696, %v796
    %v813 = vadd.f32 %v697, %v797
    %v814 = vadd.f32 %v698, %v798
    %v815 = vld [vmem:[#allocation8] sm:$0xff]
    %v816 = vld [vmem:[#allocation8 + $0x8] sm:$0xff]
    %v819 = vlaneseq
    %v820 = vshrl.u32 %v819, 7
    %v821 = vsub.s32 0, %v820
    %v822 = vrot.slane %v815, %v821
    %v823 = vlaneseq
    %v824 = vshrl.u32 %v823, 7
    %v825 = vsub.s32 1, %v824
    %v826 = vrot.slane %v815, %v825
    %v827 = vlaneseq
    %v828 = vshrl.u32 %v827, 7
    %v829 = vsub.s32 2, %v828
    %v830 = vrot.slane %v815, %v829
    %v831 = vlaneseq
    %v832 = vshrl.u32 %v831, 7
    %v833 = vsub.s32 3, %v832
    %v834 = vrot.slane %v815, %v833
    %v835 = vlaneseq
    %v836 = vshrl.u32 %v835, 7
    %v837 = vsub.s32 4, %v836
    %v838 = vrot.slane %v815, %v837
    %v839 = vlaneseq
    %v840 = vshrl.u32 %v839, 7
    %v841 = vsub.s32 5, %v840
    %v842 = vrot.slane %v815, %v841
    %v843 = vlaneseq
    %v844 = vshrl.u32 %v843, 7
    %v845 = vsub.s32 6, %v844
    %v846 = vrot.slane %v815, %v845
    %v847 = vlaneseq
    %v848 = vshrl.u32 %v847, 7
    %v849 = vsub.s32 7, %v848
    %v850 = vrot.slane %v815, %v849
    %v851 = vlaneseq
    %v852 = vshrl.u32 %v851, 7
    %v853 = vsub.s32 0, %v852
    %v854 = vrot.slane %v816, %v853
    %v855 = vlaneseq
    %v856 = vshrl.u32 %v855, 7
    %v857 = vsub.s32 1, %v856
    %v858 = vrot.slane %v816, %v857
    %v859 = vlaneseq
    %v860 = vshrl.u32 %v859, 7
    %v861 = vsub.s32 2, %v860
    %v862 = vrot.slane %v816, %v861
    %v863 = vlaneseq
    %v864 = vshrl.u32 %v863, 7
    %v865 = vsub.s32 3, %v864
    %v866 = vrot.slane %v816, %v865
    %v867 = vlaneseq
    %v868 = vshrl.u32 %v867, 7
    %v869 = vsub.s32 4, %v868
    %v870 = vrot.slane %v816, %v869
    %v871 = vlaneseq
    %v872 = vshrl.u32 %v871, 7
    %v873 = vsub.s32 5, %v872
    %v874 = vrot.slane %v816, %v873
    %v875 = vlaneseq
    %v876 = vshrl.u32 %v875, 7
    %v877 = vsub.s32 6, %v876
    %v878 = vrot.slane %v816, %v877
    %v879 = vlaneseq
    %v880 = vshrl.u32 %v879, 7
    %v881 = vsub.s32 7, %v880
    %v882 = vrot.slane %v816, %v881
    %v899 = vadd.f32 %v799, %v822
    %v900 = vadd.f32 %v800, %v826
    %v901 = vadd.f32 %v801, %v830
    %v902 = vadd.f32 %v802, %v834
    %v903 = vadd.f32 %v803, %v838
    %v904 = vadd.f32 %v804, %v842
    %v905 = vadd.f32 %v805, %v846
    %v906 = vadd.f32 %v806, %v850
    %v907 = vadd.f32 %v807, %v854
    %v908 = vadd.f32 %v808, %v858
    %v909 = vadd.f32 %v809, %v862
    %v910 = vadd.f32 %v810, %v866
    %v911 = vadd.f32 %v811, %v870
    %v912 = vadd.f32 %v812, %v874
    %v913 = vadd.f32 %v813, %v878
    %v914 = vadd.f32 %v814, %v882
    %v915 = vmax.f32 %v899, 0.0
    %v916 = vmax.f32 %v900, 0.0
    %v917 = vmax.f32 %v901, 0.0
    %v918 = vmax.f32 %v902, 0.0
    %v919 = vmax.f32 %v903, 0.0
    %v920 = vmax.f32 %v904, 0.0
    %v921 = vmax.f32 %v905, 0.0
    %v922 = vmax.f32 %v906, 0.0
    %v923 = vmax.f32 %v907, 0.0
    %v924 = vmax.f32 %v908, 0.0
    %v925 = vmax.f32 %v909, 0.0
    %v926 = vmax.f32 %v910, 0.0
    %v927 = vmax.f32 %v911, 0.0
    %v928 = vmax.f32 %v912, 0.0
    %v929 = vmax.f32 %v913, 0.0
    %v930 = vmax.f32 %v914, 0.0
    %v931 = vld [vmem:[#allocation10] sm:$0xff]
    %v932 = vld [vmem:[#allocation10 + $0x8] sm:$0xff]
    %v933 = vld [vmem:[#allocation10 + $0x10] sm:$0xff]
    %v934 = vld [vmem:[#allocation10 + $0x18] sm:$0xff]
    %v935 = vld [vmem:[#allocation10 + $0x20] sm:$0xff]
    %v936 = vld [vmem:[#allocation10 + $0x28] sm:$0xff]
    %v937 = vld [vmem:[#allocation10 + $0x30] sm:$0xff]
    %v938 = vld [vmem:[#allocation10 + $0x38] sm:$0xff]
    %v939 = vld [vmem:[%s5] sm:$0x1]
    %v941 = vlaneseq
    %v942 = vshrl.u32 %v941, 7
    %v943 = vsub.s32 0, %v942
    %v944 = vrot.slane %v939, %v943
    %v954 = vcombine.high %v931, %v931
    %v955 = vcombine.high %v932, %v932
    %v956 = vcombine.high %v933, %v933
    %v957 = vcombine.high %v934, %v934
    %v958 = vcombine.high %v935, %v935
    %v959 = vcombine.high %v936, %v936
    %v960 = vcombine.high %v937, %v937
    %v961 = vcombine.high %v938, %v938
    %970 = vmatprep.subr.mxu0 %v954
    %971 = vmatpush1.xpose.msra.mxu0 %v931
    %972 = vmatprep.subr.mxu0 0.0
    %973 = vmatpush1.xpose.msra.mxu0 0.0
    %974 = vmatprep.subr.mxu0 0.0
    %975 = vmatpush1.xpose.msra.mxu0 0.0
    %976 = vmatprep.subr.mxu0 0.0
    %977 = vmatpush1.xpose.msra.mxu0 0.0
    %978 = vmatprep.subr.mxu0 0.0
    %979 = vmatpush1.xpose.msra.mxu0 0.0
    %980 = vmatprep.subr.mxu0 0.0
    %981 = vmatpush1.xpose.msra.mxu0 0.0
    %982 = vmatprep.subr.mxu0 0.0
    %983 = vmatpush1.xpose.msra.mxu0 0.0
    %984 = vmatprep.subr.mxu0 0.0
    %985 = vmatpush1.xpose.msra.mxu0 0.0
    %986 = vmatprep.subr.mxu0 0.0
    %987 = vmatpush1.xpose.msra.mxu0 0.0
    %988 = vmatprep.subr.mxu0 0.0
    %989 = vmatpush1.xpose.msra.mxu0 0.0
    %990 = vmatprep.subr.mxu0 0.0
    %991 = vmatpush1.xpose.msra.mxu0 0.0
    %992 = vmatprep.subr.mxu0 0.0
    %993 = vmatpush1.xpose.msra.mxu0 0.0
    %994 = vmatprep.subr.mxu0 0.0
    %995 = vmatpush1.xpose.msra.mxu0 0.0
    %996 = vmatprep.subr.mxu0 0.0
    %997 = vmatpush1.xpose.msra.mxu0 0.0
    %998 = vmatprep.subr.mxu0 0.0
    %999 = vmatpush1.xpose.msra.mxu0 0.0
    %1000 = vmatprep.subr.mxu0 0.0
    %1001 = vmatpush1.xpose.msra.mxu0 0.0
    %1002 = vmatprep.subr.mxu0 0.0
    %1003 = vmatpush1.xpose.msra.mxu0 0.0
    %1004 = vmatprep.subr.mxu0 0.0
    %1005 = vmatpush1.xpose.msra.mxu0 0.0
    %1006 = vmatprep.subr.mxu0 0.0
    %1007 = vmatpush1.xpose.msra.mxu0 0.0
    %1008 = vmatprep.subr.mxu0 0.0
    %1009 = vmatpush1.xpose.msra.mxu0 0.0
    %1010 = vmatprep.subr.mxu0 0.0
    %1011 = vmatpush1.xpose.msra.mxu0 0.0
    %1012 = vmatprep.subr.mxu0 0.0
    %1013 = vmatpush1.xpose.msra.mxu0 0.0
    %1014 = vmatprep.subr.mxu0 0.0
    %1015 = vmatpush1.xpose.msra.mxu0 0.0
    %1016 = vmatprep.subr.mxu0 0.0
    %1017 = vmatpush1.xpose.msra.mxu0 0.0
    %1018 = vmatprep.subr.mxu0 0.0
    %1019 = vmatpush1.xpose.msra.mxu0 0.0
    %1020 = vmatprep.subr.mxu0 0.0
    %1021 = vmatpush1.xpose.msra.mxu0 0.0
    %1022 = vmatprep.subr.mxu0 0.0
    %1023 = vmatpush1.xpose.msra.mxu0 0.0
    %1024 = vmatprep.subr.mxu0 0.0
    %1025 = vmatpush1.xpose.msra.mxu0 0.0
    %1026 = vmatprep.subr.mxu0 0.0
    %1027 = vmatpush1.xpose.msra.mxu0 0.0
    %1028 = vmatprep.subr.mxu0 0.0
    %1029 = vmatpush1.xpose.msra.mxu0 0.0
    %1030 = vmatprep.subr.mxu0 0.0
    %1031 = vmatpush1.xpose.msra.mxu0 0.0
    %1032 = vmatprep.subr.mxu0 0.0
    %1033 = vmatpush1.xpose.msra.mxu0 0.0
    %1034 = vmatprep.mubr.f32.mxu0 %v916
    %1035 = vmatmul.mubr.f32.gmra.mrb[0].mxu0 %v915
    %v1036 = vpop.f32.mrb[0].mxu0
    %v1037 = vadd.f32 %v944, %v1036
    %v1038 = vpop.f32.mrb[0].mxu0
    %1039 = vdwg.mxu0
    %1040 = vmatprep.subr.mxu0 %v955
    %1041 = vmatpush1.xpose.msra.mxu0 %v932
    %1042 = vmatprep.subr.mxu0 0.0
    %1043 = vmatpush1.xpose.msra.mxu0 0.0
    %1044 = vmatprep.subr.mxu0 0.0
    %1045 = vmatpush1.xpose.msra.mxu0 0.0
    %1046 = vmatprep.subr.mxu0 0.0
    %1047 = vmatpush1.xpose.msra.mxu0 0.0
    %1048 = vmatprep.subr.mxu0 0.0
    %1049 = vmatpush1.xpose.msra.mxu0 0.0
    %1050 = vmatprep.subr.mxu0 0.0
    %1051 = vmatpush1.xpose.msra.mxu0 0.0
    %1052 = vmatprep.subr.mxu0 0.0
    %1053 = vmatpush1.xpose.msra.mxu0 0.0
    %1054 = vmatprep.subr.mxu0 0.0
    %1055 = vmatpush1.xpose.msra.mxu0 0.0
    %1056 = vmatprep.subr.mxu0 0.0
    %1057 = vmatpush1.xpose.msra.mxu0 0.0
    %1058 = vmatprep.subr.mxu0 0.0
    %1059 = vmatpush1.xpose.msra.mxu0 0.0
    %1060 = vmatprep.subr.mxu0 0.0
    %1061 = vmatpush1.xpose.msra.mxu0 0.0
    %1062 = vmatprep.subr.mxu0 0.0
    %1063 = vmatpush1.xpose.msra.mxu0 0.0
    %1064 = vmatprep.subr.mxu0 0.0
    %1065 = vmatpush1.xpose.msra.mxu0 0.0
    %1066 = vmatprep.subr.mxu0 0.0
    %1067 = vmatpush1.xpose.msra.mxu0 0.0
    %1068 = vmatprep.subr.mxu0 0.0
    %1069 = vmatpush1.xpose.msra.mxu0 0.0
    %1070 = vmatprep.subr.mxu0 0.0
    %1071 = vmatpush1.xpose.msra.mxu0 0.0
    %1072 = vmatprep.subr.mxu0 0.0
    %1073 = vmatpush1.xpose.msra.mxu0 0.0
    %1074 = vmatprep.subr.mxu0 0.0
    %1075 = vmatpush1.xpose.msra.mxu0 0.0
    %1076 = vmatprep.subr.mxu0 0.0
    %1077 = vmatpush1.xpose.msra.mxu0 0.0
    %1078 = vmatprep.subr.mxu0 0.0
    %1079 = vmatpush1.xpose.msra.mxu0 0.0
    %1080 = vmatprep.subr.mxu0 0.0
    %1081 = vmatpush1.xpose.msra.mxu0 0.0
    %1082 = vmatprep.subr.mxu0 0.0
    %1083 = vmatpush1.xpose.msra.mxu0 0.0
    %1084 = vmatprep.subr.mxu0 0.0
    %1085 = vmatpush1.xpose.msra.mxu0 0.0
    %1086 = vmatprep.subr.mxu0 0.0
    %1087 = vmatpush1.xpose.msra.mxu0 0.0
    %1088 = vmatprep.subr.mxu0 0.0
    %1089 = vmatpush1.xpose.msra.mxu0 0.0
    %1090 = vmatprep.subr.mxu0 0.0
    %1091 = vmatpush1.xpose.msra.mxu0 0.0
    %1092 = vmatprep.subr.mxu0 0.0
    %1093 = vmatpush1.xpose.msra.mxu0 0.0
    %1094 = vmatprep.subr.mxu0 0.0
    %1095 = vmatpush1.xpose.msra.mxu0 0.0
    %1096 = vmatprep.subr.mxu0 0.0
    %1097 = vmatpush1.xpose.msra.mxu0 0.0
    %1098 = vmatprep.subr.mxu0 0.0
    %1099 = vmatpush1.xpose.msra.mxu0 0.0
    %1100 = vmatprep.subr.mxu0 0.0
    %1101 = vmatpush1.xpose.msra.mxu0 0.0
    %1102 = vmatprep.subr.mxu0 0.0
    %1103 = vmatpush1.xpose.msra.mxu0 0.0
    %1104 = vmatprep.mubr.f32.mxu0 %v918
    %1105 = vmatmul.mubr.f32.gmra.mrb[0].mxu0 %v917
    %v1106 = vpop.f32.mrb[0].mxu0
    %v1107 = vadd.f32 %v1037, %v1106
    %v1108 = vpop.f32.mrb[0].mxu0
    %1109 = vdwg.mxu0
    %1110 = vmatprep.subr.mxu0 %v956
    %1111 = vmatpush1.xpose.msra.mxu0 %v933
    %1112 = vmatprep.subr.mxu0 0.0
    %1113 = vmatpush1.xpose.msra.mxu0 0.0
    %1114 = vmatprep.subr.mxu0 0.0
    %1115 = vmatpush1.xpose.msra.mxu0 0.0
    %1116 = vmatprep.subr.mxu0 0.0
    %1117 = vmatpush1.xpose.msra.mxu0 0.0
    %1118 = vmatprep.subr.mxu0 0.0
    %1119 = vmatpush1.xpose.msra.mxu0 0.0
    %1120 = vmatprep.subr.mxu0 0.0
    %1121 = vmatpush1.xpose.msra.mxu0 0.0
    %1122 = vmatprep.subr.mxu0 0.0
    %1123 = vmatpush1.xpose.msra.mxu0 0.0
    %1124 = vmatprep.subr.mxu0 0.0
    %1125 = vmatpush1.xpose.msra.mxu0 0.0
    %1126 = vmatprep.subr.mxu0 0.0
    %1127 = vmatpush1.xpose.msra.mxu0 0.0
    %1128 = vmatprep.subr.mxu0 0.0
    %1129 = vmatpush1.xpose.msra.mxu0 0.0
    %1130 = vmatprep.subr.mxu0 0.0
    %1131 = vmatpush1.xpose.msra.mxu0 0.0
    %1132 = vmatprep.subr.mxu0 0.0
    %1133 = vmatpush1.xpose.msra.mxu0 0.0
    %1134 = vmatprep.subr.mxu0 0.0
    %1135 = vmatpush1.xpose.msra.mxu0 0.0
    %1136 = vmatprep.subr.mxu0 0.0
    %1137 = vmatpush1.xpose.msra.mxu0 0.0
    %1138 = vmatprep.subr.mxu0 0.0
    %1139 = vmatpush1.xpose.msra.mxu0 0.0
    %1140 = vmatprep.subr.mxu0 0.0
    %1141 = vmatpush1.xpose.msra.mxu0 0.0
    %1142 = vmatprep.subr.mxu0 0.0
    %1143 = vmatpush1.xpose.msra.mxu0 0.0
    %1144 = vmatprep.subr.mxu0 0.0
    %1145 = vmatpush1.xpose.msra.mxu0 0.0
    %1146 = vmatprep.subr.mxu0 0.0
    %1147 = vmatpush1.xpose.msra.mxu0 0.0
    %1148 = vmatprep.subr.mxu0 0.0
    %1149 = vmatpush1.xpose.msra.mxu0 0.0
    %1150 = vmatprep.subr.mxu0 0.0
    %1151 = vmatpush1.xpose.msra.mxu0 0.0
    %1152 = vmatprep.subr.mxu0 0.0
    %1153 = vmatpush1.xpose.msra.mxu0 0.0
    %1154 = vmatprep.subr.mxu0 0.0
    %1155 = vmatpush1.xpose.msra.mxu0 0.0
    %1156 = vmatprep.subr.mxu0 0.0
    %1157 = vmatpush1.xpose.msra.mxu0 0.0
    %1158 = vmatprep.subr.mxu0 0.0
    %1159 = vmatpush1.xpose.msra.mxu0 0.0
    %1160 = vmatprep.subr.mxu0 0.0
    %1161 = vmatpush1.xpose.msra.mxu0 0.0
    %1162 = vmatprep.subr.mxu0 0.0
    %1163 = vmatpush1.xpose.msra.mxu0 0.0
    %1164 = vmatprep.subr.mxu0 0.0
    %1165 = vmatpush1.xpose.msra.mxu0 0.0
    %1166 = vmatprep.subr.mxu0 0.0
    %1167 = vmatpush1.xpose.msra.mxu0 0.0
    %1168 = vmatprep.subr.mxu0 0.0
    %1169 = vmatpush1.xpose.msra.mxu0 0.0
    %1170 = vmatprep.subr.mxu0 0.0
    %1171 = vmatpush1.xpose.msra.mxu0 0.0
    %1172 = vmatprep.subr.mxu0 0.0
    %1173 = vmatpush1.xpose.msra.mxu0 0.0
    %1174 = vmatprep.mubr.f32.mxu0 %v920
    %1175 = vmatmul.mubr.f32.gmra.mrb[0].mxu0 %v919
    %v1176 = vpop.f32.mrb[0].mxu0
    %v1177 = vadd.f32 %v1107, %v1176
    %v1178 = vpop.f32.mrb[0].mxu0
    %1179 = vdwg.mxu0
    %1180 = vmatprep.subr.mxu0 %v957
    %1181 = vmatpush1.xpose.msra.mxu0 %v934
    %1182 = vmatprep.subr.mxu0 0.0
    %1183 = vmatpush1.xpose.msra.mxu0 0.0
    %1184 = vmatprep.subr.mxu0 0.0
    %1185 = vmatpush1.xpose.msra.mxu0 0.0
    %1186 = vmatprep.subr.mxu0 0.0
    %1187 = vmatpush1.xpose.msra.mxu0 0.0
    %1188 = vmatprep.subr.mxu0 0.0
    %1189 = vmatpush1.xpose.msra.mxu0 0.0
    %1190 = vmatprep.subr.mxu0 0.0
    %1191 = vmatpush1.xpose.msra.mxu0 0.0
    %1192 = vmatprep.subr.mxu0 0.0
    %1193 = vmatpush1.xpose.msra.mxu0 0.0
    %1194 = vmatprep.subr.mxu0 0.0
    %1195 = vmatpush1.xpose.msra.mxu0 0.0
    %1196 = vmatprep.subr.mxu0 0.0
    %1197 = vmatpush1.xpose.msra.mxu0 0.0
    %1198 = vmatprep.subr.mxu0 0.0
    %1199 = vmatpush1.xpose.msra.mxu0 0.0
    %1200 = vmatprep.subr.mxu0 0.0
    %1201 = vmatpush1.xpose.msra.mxu0 0.0
    %1202 = vmatprep.subr.mxu0 0.0
    %1203 = vmatpush1.xpose.msra.mxu0 0.0
    %1204 = vmatprep.subr.mxu0 0.0
    %1205 = vmatpush1.xpose.msra.mxu0 0.0
    %1206 = vmatprep.subr.mxu0 0.0
    %1207 = vmatpush1.xpose.msra.mxu0 0.0
    %1208 = vmatprep.subr.mxu0 0.0
    %1209 = vmatpush1.xpose.msra.mxu0 0.0
    %1210 = vmatprep.subr.mxu0 0.0
    %1211 = vmatpush1.xpose.msra.mxu0 0.0
    %1212 = vmatprep.subr.mxu0 0.0
    %1213 = vmatpush1.xpose.msra.mxu0 0.0
    %1214 = vmatprep.subr.mxu0 0.0
    %1215 = vmatpush1.xpose.msra.mxu0 0.0
    %1216 = vmatprep.subr.mxu0 0.0
    %1217 = vmatpush1.xpose.msra.mxu0 0.0
    %1218 = vmatprep.subr.mxu0 0.0
    %1219 = vmatpush1.xpose.msra.mxu0 0.0
    %1220 = vmatprep.subr.mxu0 0.0
    %1221 = vmatpush1.xpose.msra.mxu0 0.0
    %1222 = vmatprep.subr.mxu0 0.0
    %1223 = vmatpush1.xpose.msra.mxu0 0.0
    %1224 = vmatprep.subr.mxu0 0.0
    %1225 = vmatpush1.xpose.msra.mxu0 0.0
    %1226 = vmatprep.subr.mxu0 0.0
    %1227 = vmatpush1.xpose.msra.mxu0 0.0
    %1228 = vmatprep.subr.mxu0 0.0
    %1229 = vmatpush1.xpose.msra.mxu0 0.0
    %1230 = vmatprep.subr.mxu0 0.0
    %1231 = vmatpush1.xpose.msra.mxu0 0.0
    %1232 = vmatprep.subr.mxu0 0.0
    %1233 = vmatpush1.xpose.msra.mxu0 0.0
    %1234 = vmatprep.subr.mxu0 0.0
    %1235 = vmatpush1.xpose.msra.mxu0 0.0
    %1236 = vmatprep.subr.mxu0 0.0
    %1237 = vmatpush1.xpose.msra.mxu0 0.0
    %1238 = vmatprep.subr.mxu0 0.0
    %1239 = vmatpush1.xpose.msra.mxu0 0.0
    %1240 = vmatprep.subr.mxu0 0.0
    %1241 = vmatpush1.xpose.msra.mxu0 0.0
    %1242 = vmatprep.subr.mxu0 0.0
    %1243 = vmatpush1.xpose.msra.mxu0 0.0
    %1244 = vmatprep.mubr.f32.mxu0 %v922
    %1245 = vmatmul.mubr.f32.gmra.mrb[0].mxu0 %v921
    %v1246 = vpop.f32.mrb[0].mxu0
    %v1247 = vadd.f32 %v1177, %v1246
    %v1248 = vpop.f32.mrb[0].mxu0
    %1249 = vdwg.mxu0
    %1250 = vmatprep.subr.mxu0 %v958
    %1251 = vmatpush1.xpose.msra.mxu0 %v935
    %1252 = vmatprep.subr.mxu0 0.0
    %1253 = vmatpush1.xpose.msra.mxu0 0.0
    %1254 = vmatprep.subr.mxu0 0.0
    %1255 = vmatpush1.xpose.msra.mxu0 0.0
    %1256 = vmatprep.subr.mxu0 0.0
    %1257 = vmatpush1.xpose.msra.mxu0 0.0
    %1258 = vmatprep.subr.mxu0 0.0
    %1259 = vmatpush1.xpose.msra.mxu0 0.0
    %1260 = vmatprep.subr.mxu0 0.0
    %1261 = vmatpush1.xpose.msra.mxu0 0.0
    %1262 = vmatprep.subr.mxu0 0.0
    %1263 = vmatpush1.xpose.msra.mxu0 0.0
    %1264 = vmatprep.subr.mxu0 0.0
    %1265 = vmatpush1.xpose.msra.mxu0 0.0
    %1266 = vmatprep.subr.mxu0 0.0
    %1267 = vmatpush1.xpose.msra.mxu0 0.0
    %1268 = vmatprep.subr.mxu0 0.0
    %1269 = vmatpush1.xpose.msra.mxu0 0.0
    %1270 = vmatprep.subr.mxu0 0.0
    %1271 = vmatpush1.xpose.msra.mxu0 0.0
    %1272 = vmatprep.subr.mxu0 0.0
    %1273 = vmatpush1.xpose.msra.mxu0 0.0
    %1274 = vmatprep.subr.mxu0 0.0
    %1275 = vmatpush1.xpose.msra.mxu0 0.0
    %1276 = vmatprep.subr.mxu0 0.0
    %1277 = vmatpush1.xpose.msra.mxu0 0.0
    %1278 = vmatprep.subr.mxu0 0.0
    %1279 = vmatpush1.xpose.msra.mxu0 0.0
    %1280 = vmatprep.subr.mxu0 0.0
    %1281 = vmatpush1.xpose.msra.mxu0 0.0
    %1282 = vmatprep.subr.mxu0 0.0
    %1283 = vmatpush1.xpose.msra.mxu0 0.0
    %1284 = vmatprep.subr.mxu0 0.0
    %1285 = vmatpush1.xpose.msra.mxu0 0.0
    %1286 = vmatprep.subr.mxu0 0.0
    %1287 = vmatpush1.xpose.msra.mxu0 0.0
    %1288 = vmatprep.subr.mxu0 0.0
    %1289 = vmatpush1.xpose.msra.mxu0 0.0
    %1290 = vmatprep.subr.mxu0 0.0
    %1291 = vmatpush1.xpose.msra.mxu0 0.0
    %1292 = vmatprep.subr.mxu0 0.0
    %1293 = vmatpush1.xpose.msra.mxu0 0.0
    %1294 = vmatprep.subr.mxu0 0.0
    %1295 = vmatpush1.xpose.msra.mxu0 0.0
    %1296 = vmatprep.subr.mxu0 0.0
    %1297 = vmatpush1.xpose.msra.mxu0 0.0
    %1298 = vmatprep.subr.mxu0 0.0
    %1299 = vmatpush1.xpose.msra.mxu0 0.0
    %1300 = vmatprep.subr.mxu0 0.0
    %1301 = vmatpush1.xpose.msra.mxu0 0.0
    %1302 = vmatprep.subr.mxu0 0.0
    %1303 = vmatpush1.xpose.msra.mxu0 0.0
    %1304 = vmatprep.subr.mxu0 0.0
    %1305 = vmatpush1.xpose.msra.mxu0 0.0
    %1306 = vmatprep.subr.mxu0 0.0
    %1307 = vmatpush1.xpose.msra.mxu0 0.0
    %1308 = vmatprep.subr.mxu0 0.0
    %1309 = vmatpush1.xpose.msra.mxu0 0.0
    %1310 = vmatprep.subr.mxu0 0.0
    %1311 = vmatpush1.xpose.msra.mxu0 0.0
    %1312 = vmatprep.subr.mxu0 0.0
    %1313 = vmatpush1.xpose.msra.mxu0 0.0
    %1314 = vmatprep.mubr.f32.mxu0 %v924
    %1315 = vmatmul.mubr.f32.gmra.mrb[0].mxu0 %v923
    %v1316 = vpop.f32.mrb[0].mxu0
    %v1317 = vadd.f32 %v1247, %v1316
    %v1318 = vpop.f32.mrb[0].mxu0
    %1319 = vdwg.mxu0
    %1320 = vmatprep.subr.mxu0 %v959
    %1321 = vmatpush1.xpose.msra.mxu0 %v936
    %1322 = vmatprep.subr.mxu0 0.0
    %1323 = vmatpush1.xpose.msra.mxu0 0.0
    %1324 = vmatprep.subr.mxu0 0.0
    %1325 = vmatpush1.xpose.msra.mxu0 0.0
    %1326 = vmatprep.subr.mxu0 0.0
    %1327 = vmatpush1.xpose.msra.mxu0 0.0
    %1328 = vmatprep.subr.mxu0 0.0
    %1329 = vmatpush1.xpose.msra.mxu0 0.0
    %1330 = vmatprep.subr.mxu0 0.0
    %1331 = vmatpush1.xpose.msra.mxu0 0.0
    %1332 = vmatprep.subr.mxu0 0.0
    %1333 = vmatpush1.xpose.msra.mxu0 0.0
    %1334 = vmatprep.subr.mxu0 0.0
    %1335 = vmatpush1.xpose.msra.mxu0 0.0
    %1336 = vmatprep.subr.mxu0 0.0
    %1337 = vmatpush1.xpose.msra.mxu0 0.0
    %1338 = vmatprep.subr.mxu0 0.0
    %1339 = vmatpush1.xpose.msra.mxu0 0.0
    %1340 = vmatprep.subr.mxu0 0.0
    %1341 = vmatpush1.xpose.msra.mxu0 0.0
    %1342 = vmatprep.subr.mxu0 0.0
    %1343 = vmatpush1.xpose.msra.mxu0 0.0
    %1344 = vmatprep.subr.mxu0 0.0
    %1345 = vmatpush1.xpose.msra.mxu0 0.0
    %1346 = vmatprep.subr.mxu0 0.0
    %1347 = vmatpush1.xpose.msra.mxu0 0.0
    %1348 = vmatprep.subr.mxu0 0.0
    %1349 = vmatpush1.xpose.msra.mxu0 0.0
    %1350 = vmatprep.subr.mxu0 0.0
    %1351 = vmatpush1.xpose.msra.mxu0 0.0
    %1352 = vmatprep.subr.mxu0 0.0
    %1353 = vmatpush1.xpose.msra.mxu0 0.0
    %1354 = vmatprep.subr.mxu0 0.0
    %1355 = vmatpush1.xpose.msra.mxu0 0.0
    %1356 = vmatprep.subr.mxu0 0.0
    %1357 = vmatpush1.xpose.msra.mxu0 0.0
    %1358 = vmatprep.subr.mxu0 0.0
    %1359 = vmatpush1.xpose.msra.mxu0 0.0
    %1360 = vmatprep.subr.mxu0 0.0
    %1361 = vmatpush1.xpose.msra.mxu0 0.0
    %1362 = vmatprep.subr.mxu0 0.0
    %1363 = vmatpush1.xpose.msra.mxu0 0.0
    %1364 = vmatprep.subr.mxu0 0.0
    %1365 = vmatpush1.xpose.msra.mxu0 0.0
    %1366 = vmatprep.subr.mxu0 0.0
    %1367 = vmatpush1.xpose.msra.mxu0 0.0
    %1368 = vmatprep.subr.mxu0 0.0
    %1369 = vmatpush1.xpose.msra.mxu0 0.0
    %1370 = vmatprep.subr.mxu0 0.0
    %1371 = vmatpush1.xpose.msra.mxu0 0.0
    %1372 = vmatprep.subr.mxu0 0.0
    %1373 = vmatpush1.xpose.msra.mxu0 0.0
    %1374 = vmatprep.subr.mxu0 0.0
    %1375 = vmatpush1.xpose.msra.mxu0 0.0
    %1376 = vmatprep.subr.mxu0 0.0
    %1377 = vmatpush1.xpose.msra.mxu0 0.0
    %1378 = vmatprep.subr.mxu0 0.0
    %1379 = vmatpush1.xpose.msra.mxu0 0.0
    %1380 = vmatprep.subr.mxu0 0.0
    %1381 = vmatpush1.xpose.msra.mxu0 0.0
    %1382 = vmatprep.subr.mxu0 0.0
    %1383 = vmatpush1.xpose.msra.mxu0 0.0
    %1384 = vmatprep.mubr.f32.mxu0 %v926
    %1385 = vmatmul.mubr.f32.gmra.mrb[0].mxu0 %v925
    %v1386 = vpop.f32.mrb[0].mxu0
    %v1387 = vadd.f32 %v1317, %v1386
    %v1388 = vpop.f32.mrb[0].mxu0
    %1389 = vdwg.mxu0
    %1390 = vmatprep.subr.mxu0 %v960
    %1391 = vmatpush1.xpose.msra.mxu0 %v937
    %1392 = vmatprep.subr.mxu0 0.0
    %1393 = vmatpush1.xpose.msra.mxu0 0.0
    %1394 = vmatprep.subr.mxu0 0.0
    %1395 = vmatpush1.xpose.msra.mxu0 0.0
    %1396 = vmatprep.subr.mxu0 0.0
    %1397 = vmatpush1.xpose.msra.mxu0 0.0
    %1398 = vmatprep.subr.mxu0 0.0
    %1399 = vmatpush1.xpose.msra.mxu0 0.0
    %1400 = vmatprep.subr.mxu0 0.0
    %1401 = vmatpush1.xpose.msra.mxu0 0.0
    %1402 = vmatprep.subr.mxu0 0.0
    %1403 = vmatpush1.xpose.msra.mxu0 0.0
    %1404 = vmatprep.subr.mxu0 0.0
    %1405 = vmatpush1.xpose.msra.mxu0 0.0
    %1406 = vmatprep.subr.mxu0 0.0
    %1407 = vmatpush1.xpose.msra.mxu0 0.0
    %1408 = vmatprep.subr.mxu0 0.0
    %1409 = vmatpush1.xpose.msra.mxu0 0.0
    %1410 = vmatprep.subr.mxu0 0.0
    %1411 = vmatpush1.xpose.msra.mxu0 0.0
    %1412 = vmatprep.subr.mxu0 0.0
    %1413 = vmatpush1.xpose.msra.mxu0 0.0
    %1414 = vmatprep.subr.mxu0 0.0
    %1415 = vmatpush1.xpose.msra.mxu0 0.0
    %1416 = vmatprep.subr.mxu0 0.0
    %1417 = vmatpush1.xpose.msra.mxu0 0.0
    %1418 = vmatprep.subr.mxu0 0.0
    %1419 = vmatpush1.xpose.msra.mxu0 0.0
    %1420 = vmatprep.subr.mxu0 0.0
    %1421 = vmatpush1.xpose.msra.mxu0 0.0
    %1422 = vmatprep.subr.mxu0 0.0
    %1423 = vmatpush1.xpose.msra.mxu0 0.0
    %1424 = vmatprep.subr.mxu0 0.0
    %1425 = vmatpush1.xpose.msra.mxu0 0.0
    %1426 = vmatprep.subr.mxu0 0.0
    %1427 = vmatpush1.xpose.msra.mxu0 0.0
    %1428 = vmatprep.subr.mxu0 0.0
    %1429 = vmatpush1.xpose.msra.mxu0 0.0
    %1430 = vmatprep.subr.mxu0 0.0
    %1431 = vmatpush1.xpose.msra.mxu0 0.0
    %1432 = vmatprep.subr.mxu0 0.0
    %1433 = vmatpush1.xpose.msra.mxu0 0.0
    %1434 = vmatprep.subr.mxu0 0.0
    %1435 = vmatpush1.xpose.msra.mxu0 0.0
    %1436 = vmatprep.subr.mxu0 0.0
    %1437 = vmatpush1.xpose.msra.mxu0 0.0
    %1438 = vmatprep.subr.mxu0 0.0
    %1439 = vmatpush1.xpose.msra.mxu0 0.0
    %1440 = vmatprep.subr.mxu0 0.0
    %1441 = vmatpush1.xpose.msra.mxu0 0.0
    %1442 = vmatprep.subr.mxu0 0.0
    %1443 = vmatpush1.xpose.msra.mxu0 0.0
    %1444 = vmatprep.subr.mxu0 0.0
    %1445 = vmatpush1.xpose.msra.mxu0 0.0
    %1446 = vmatprep.subr.mxu0 0.0
    %1447 = vmatpush1.xpose.msra.mxu0 0.0
    %1448 = vmatprep.subr.mxu0 0.0
    %1449 = vmatpush1.xpose.msra.mxu0 0.0
    %1450 = vmatprep.subr.mxu0 0.0
    %1451 = vmatpush1.xpose.msra.mxu0 0.0
    %1452 = vmatprep.subr.mxu0 0.0
    %1453 = vmatpush1.xpose.msra.mxu0 0.0
    %1454 = vmatprep.mubr.f32.mxu0 %v928
    %1455 = vmatmul.mubr.f32.gmra.mrb[0].mxu0 %v927
    %v1456 = vpop.f32.mrb[0].mxu0
    %v1457 = vadd.f32 %v1387, %v1456
    %v1458 = vpop.f32.mrb[0].mxu0
    %1459 = vdwg.mxu0
    %1460 = vmatprep.subr.mxu0 %v961
    %1461 = vmatpush1.xpose.msra.mxu0 %v938
    %1462 = vmatprep.subr.mxu0 0.0
    %1463 = vmatpush1.xpose.msra.mxu0 0.0
    %1464 = vmatprep.subr.mxu0 0.0
    %1465 = vmatpush1.xpose.msra.mxu0 0.0
    %1466 = vmatprep.subr.mxu0 0.0
    %1467 = vmatpush1.xpose.msra.mxu0 0.0
    %1468 = vmatprep.subr.mxu0 0.0
    %1469 = vmatpush1.xpose.msra.mxu0 0.0
    %1470 = vmatprep.subr.mxu0 0.0
    %1471 = vmatpush1.xpose.msra.mxu0 0.0
    %1472 = vmatprep.subr.mxu0 0.0
    %1473 = vmatpush1.xpose.msra.mxu0 0.0
    %1474 = vmatprep.subr.mxu0 0.0
    %1475 = vmatpush1.xpose.msra.mxu0 0.0
    %1476 = vmatprep.subr.mxu0 0.0
    %1477 = vmatpush1.xpose.msra.mxu0 0.0
    %1478 = vmatprep.subr.mxu0 0.0
    %1479 = vmatpush1.xpose.msra.mxu0 0.0
    %1480 = vmatprep.subr.mxu0 0.0
    %1481 = vmatpush1.xpose.msra.mxu0 0.0
    %1482 = vmatprep.subr.mxu0 0.0
    %1483 = vmatpush1.xpose.msra.mxu0 0.0
    %1484 = vmatprep.subr.mxu0 0.0
    %1485 = vmatpush1.xpose.msra.mxu0 0.0
    %1486 = vmatprep.subr.mxu0 0.0
    %1487 = vmatpush1.xpose.msra.mxu0 0.0
    %1488 = vmatprep.subr.mxu0 0.0
    %1489 = vmatpush1.xpose.msra.mxu0 0.0
    %1490 = vmatprep.subr.mxu0 0.0
    %1491 = vmatpush1.xpose.msra.mxu0 0.0
    %1492 = vmatprep.subr.mxu0 0.0
    %1493 = vmatpush1.xpose.msra.mxu0 0.0
    %1494 = vmatprep.subr.mxu0 0.0
    %1495 = vmatpush1.xpose.msra.mxu0 0.0
    %1496 = vmatprep.subr.mxu0 0.0
    %1497 = vmatpush1.xpose.msra.mxu0 0.0
    %1498 = vmatprep.subr.mxu0 0.0
    %1499 = vmatpush1.xpose.msra.mxu0 0.0
    %1500 = vmatprep.subr.mxu0 0.0
    %1501 = vmatpush1.xpose.msra.mxu0 0.0
    %1502 = vmatprep.subr.mxu0 0.0
    %1503 = vmatpush1.xpose.msra.mxu0 0.0
    %1504 = vmatprep.subr.mxu0 0.0
    %1505 = vmatpush1.xpose.msra.mxu0 0.0
    %1506 = vmatprep.subr.mxu0 0.0
    %1507 = vmatpush1.xpose.msra.mxu0 0.0
    %1508 = vmatprep.subr.mxu0 0.0
    %1509 = vmatpush1.xpose.msra.mxu0 0.0
    %1510 = vmatprep.subr.mxu0 0.0
    %1511 = vmatpush1.xpose.msra.mxu0 0.0
    %1512 = vmatprep.subr.mxu0 0.0
    %1513 = vmatpush1.xpose.msra.mxu0 0.0
    %1514 = vmatprep.subr.mxu0 0.0
    %1515 = vmatpush1.xpose.msra.mxu0 0.0
    %1516 = vmatprep.subr.mxu0 0.0
    %1517 = vmatpush1.xpose.msra.mxu0 0.0
    %1518 = vmatprep.subr.mxu0 0.0
    %1519 = vmatpush1.xpose.msra.mxu0 0.0
    %1520 = vmatprep.subr.mxu0 0.0
    %1521 = vmatpush1.xpose.msra.mxu0 0.0
    %1522 = vmatprep.subr.mxu0 0.0
    %1523 = vmatpush1.xpose.msra.mxu0 0.0
    %1524 = vmatprep.mubr.f32.mxu0 %v930
    %1525 = vmatmul.mubr.f32.gmra.mrb[0].mxu0 %v929
    %v1526 = vpop.f32.mrb[0].mxu0
    %v1527 = vadd.f32 %v1457, %v1526
    %v1528 = vpop.f32.mrb[0].mxu0
    %1529 = vdwg.mxu0
    %vm1530 = vcmask 25600
    %1531 = vst.msk [vmem:[#allocation11] sm:$0x3] %vm1530, %v1527
    // Predicated region
    $region46: #{tpu_custom_call.1} parent=1 // pred_check
      _
    $region47: #{tpu_custom_call.1} parent=1 // pred_check_branch
      %1533 = sbr.rel (0) target = $region49
    $region48: #{tpu_custom_call.1} parent=1 // pred_region
      %s1535 = ssub.s32 32, 32
      %1536 = vsyncadd [#allocation4], %s1535
      %s1538 = sshll.u32 [#allocation11], 4
      %s1539 = int_to_ptr.vmem [resolvable:$true] %s1538
      %1541 = dma.vmem_to_hbm [thread:$0]  %s1539, 32, %s6, [#allocation4]
    $region49: #{tpu_custom_call.1} parent=1 // pred_fallthru
      _
    // Predicated region
    $region50: #{tpu_custom_call.1} parent=1 // pred_check
      _
    $region51: #{tpu_custom_call.1} parent=1 // pred_check_branch
      %1543 = sbr.rel (0) target = $region53
    $region52: #{tpu_custom_call.1} parent=1 // pred_region
      %1544 = dma.done [#allocation4], 32
    $region53: #{tpu_custom_call.1} parent=1 // pred_fallthru
      _
    %1545 = vsyncpa [#allocation3], 1
    %1546 = vsyncpa [#allocation6], 1
    %1547 = vsyncpa [#allocation9], 1
    %1548 = vsyncpa [#allocation4], 1

</llo_original>
